<compile_context>
chip_gen: v7x
topology: tpu7x:2x2x1
jax: 0.10.0
libtpu: 0.0.40
codegen_flags: <defaults>
</compile_context>

<pallas_src>
import math
import jax
import jax.numpy as jnp
import numpy as np
from jax.experimental import pallas as pl
from jax.experimental.pallas import tpu as pltpu


# ----------------------------- fused Pallas kernel -----------------------------

def _make_encoder_lstm_kernel(S, Bp, H, n_layers):
    """Build a fused multi-layer LSTM kernel.

    Kernel ref order:
      x_ref (S*Bp, E) f32,
      [w_ih_l (D_in,4H), w_hh_l (H,4H), b_l (1,4H)] * n_layers,
      hid_ref (n_layers, Bp, H), cell_ref (n_layers, Bp, H),
      xproj_s (S*Bp, 4H) VMEM, seq_s (S*Bp, H) VMEM.
    """

    def kernel(*refs):
        x_ref = refs[0]
        w_refs = refs[1:1 + 3 * n_layers]
        hid_ref = refs[1 + 3 * n_layers]
        cell_ref = refs[2 + 3 * n_layers]
        xproj_s = refs[3 + 3 * n_layers]
        seq_s = refs[4 + 3 * n_layers]

        for l in range(n_layers):
            w_ih = w_refs[3 * l]      # (D_in, 4H) pre-transposed
            w_hh = w_refs[3 * l + 1]  # (H, 4H)    pre-transposed
            b = w_refs[3 * l + 2]     # (1, 4H)    = b_ih + b_hh

            # ---- hoisted input projection: one big MXU matmul over the whole
            # sequence (S*Bp rows) instead of S tiny per-step matmuls.
            layer_in = x_ref if l == 0 else seq_s
            xproj_s[...] = (
                jnp.dot(layer_in[...], w_ih[...],
                        preferred_element_type=jnp.float32) + b[...])

            write_seq = l < n_layers - 1  # last layer's sequence output unused

            # ---- serial recurrence: only h_{t-1} @ W_hh + precomputed proj.
            def step(t, carry):
                h, c = carry
                off = pl.multiple_of(t * Bp, Bp)  # Bp multiple of 8 -> aligned
                gates = xproj_s[pl.ds(off, Bp), :] + jnp.dot(
                    h, w_hh[...], preferred_element_type=jnp.float32)
                # PyTorch gate order: i, f, g, o.
                # TODO(synk): with H=32 these are sub-128-lane slices; pad H to
                # 128 (or a gate-major layout) for full-vreg VPU gate math.
                i = jax.nn.sigmoid(gates[:, 0 * H:1 * H])
                f = jax.nn.sigmoid(gates[:, 1 * H:2 * H])
                g = jnp.tanh(gates[:, 2 * H:3 * H])
                o = jax.nn.sigmoid(gates[:, 3 * H:4 * H])
                c_new = f * c + i * g
                h_new = o * jnp.tanh(c_new)
                if write_seq:
                    seq_s[pl.ds(off, Bp), :] = h_new
                return (h_new, c_new)

            h0 = jnp.zeros((Bp, H), jnp.float32)
            c0 = jnp.zeros((Bp, H), jnp.float32)
            h_n, c_n = jax.lax.fori_loop(0, S, step, (h0, c0),
                                         unroll=(S <= 32))

            # final state written exactly once per layer
            hid_ref[l] = h_n
            cell_ref[l] = c_n

    return kernel


def encoder_lstm_pallas(x, layers):
    """x: (S, B, E) f32 embedded inputs; layers: list of (w_ih, w_hh, b) in
    PyTorch shapes ((4H,D), (4H,H), (1,4H)). Returns (hidden, cell), each
    (n_layers, B, H)."""
    S, B, E = x.shape
    H = layers[0][1].shape[1]
    n_layers = len(layers)

    # Pad batch to a sublane multiple so all per-step slices are tile-aligned.
    Bp = max(8, ((B + 7) // 8) * 8)
    if Bp != B:
        x = jnp.pad(x, ((0, 0), (0, Bp - B), (0, 0)))
    x_flat = x.reshape(S * Bp, E)

    # Pre-transpose weights once outside the kernel (no .T in the hot loop).
    flat_weights = []
    for (w_ih, w_hh, b) in layers:
        flat_weights += [w_ih.T, w_hh.T, b]

    kernel = _make_encoder_lstm_kernel(S, Bp, H, n_layers)

    hidden_p, cell_p = pl.pallas_call(
        kernel,
        out_shape=(
            jax.ShapeDtypeStruct((n_layers, Bp, H), jnp.float32),
            jax.ShapeDtypeStruct((n_layers, Bp, H), jnp.float32),
        ),
        scratch_shapes=[
            pltpu.VMEM((S * Bp, 4 * H), jnp.float32),  # hoisted input projection
            pltpu.VMEM((S * Bp, H), jnp.float32),      # inter-layer activations
        ],
    )(x_flat, *flat_weights)

    return hidden_p[:, :B, :], cell_p[:, :B, :]


# ----------------------------- Encoder wrapper --------------------------------

def init_encoder_params(key, input_dim, emb_dim, hid_dim, n_layers):
    """Deterministic parameter init matching the PyTorch module's shapes."""
    params = {}
    key, k_emb = jax.random.split(key)
    params["embedding"] = jax.random.normal(k_emb, (input_dim, emb_dim), jnp.float32)

    stdv = 1.0 / math.sqrt(hid_dim)
    layers = []
    for layer in range(n_layers):
        d_in = emb_dim if layer == 0 else hid_dim
        key, k1, k2, k3, k4 = jax.random.split(key, 5)
        w_ih = jax.random.uniform(k1, (4 * hid_dim, d_in), jnp.float32, -stdv, stdv)
        w_hh = jax.random.uniform(k2, (4 * hid_dim, hid_dim), jnp.float32, -stdv, stdv)
        b_ih = jax.random.uniform(k3, (4 * hid_dim,), jnp.float32, -stdv, stdv)
        b_hh = jax.random.uniform(k4, (4 * hid_dim,), jnp.float32, -stdv, stdv)
        layers.append((w_ih, w_hh, (b_ih + b_hh).reshape(1, 4 * hid_dim)))
    params["lstm"] = layers
    return params


def encoder_forward(params, src):
    """src: (seq_len, batch) int32. Returns (hidden, cell), each (n_layers, B, H)."""
    # Embedding lookup (gather) stays in JAX glue; dropout is identity (eval).
    # TODO(synk): training-mode dropout and in-kernel embedding gather omitted.
    x = jnp.take(params["embedding"], src, axis=0)  # (S, B, emb_dim)
    return encoder_lstm_pallas(x, params["lstm"])


# ----------------------------- pure-JAX reference ------------------------------

def encoder_forward_ref(params, src):
    x = jnp.take(params["embedding"], src, axis=0)
    hs, cs = [], []
    for (w_ih, w_hh, b) in params["lstm"]:
        S, B, _ = x.shape
        H = w_hh.shape[1]

        def step(carry, x_t):
            h, c = carry
            gates = x_t @ w_ih.T + h @ w_hh.T + b
            i = jax.nn.sigmoid(gates[:, 0 * H:1 * H])
            f = jax.nn.sigmoid(gates[:, 1 * H:2 * H])
            g = jnp.tanh(gates[:, 2 * H:3 * H])
            o = jax.nn.sigmoid(gates[:, 3 * H:4 * H])
            c = f * c + i * g
            h = o * jnp.tanh(c)
            return (h, c), h

        (h_n, c_n), outs = jax.lax.scan(
            step, (jnp.zeros((B, H), jnp.float32), jnp.zeros((B, H), jnp.float32)), x)
        x = outs
        hs.append(h_n)
        cs.append(c_n)
    return jnp.stack(hs, 0), jnp.stack(cs, 0)


# ----------------------------------- main --------------------------------------

if __name__ == "__main__":
    INPUT_DIM = 50   # vocab size
    EMB_DIM = 32
    HID_DIM = 32
    N_LAYERS = 2
    SEQ_LEN = 8
    BATCH = 2

    key = jax.random.PRNGKey(0)
    key, k_src = jax.random.split(key)
    params = init_encoder_params(key, INPUT_DIM, EMB_DIM, HID_DIM, N_LAYERS)
    src = jax.random.randint(k_src, (SEQ_LEN, BATCH), 0, INPUT_DIM, dtype=jnp.int32)

    hidden, cell = encoder_forward(params, src)
    hidden, cell = jax.block_until_ready((hidden, cell))

    # sanity check against pure-JAX reference
    h_ref, c_ref = encoder_forward_ref(params, src)
    np.testing.assert_allclose(np.asarray(hidden), np.asarray(h_ref), rtol=1e-5, atol=1e-5)
    np.testing.assert_allclose(np.asarray(cell), np.asarray(c_ref), rtol=1e-5, atol=1e-5)
    assert hidden.shape == (N_LAYERS, BATCH, HID_DIM)
    assert cell.shape == (N_LAYERS, BATCH, HID_DIM)

    print("KERNEL_OK")
</pallas_src>

<mosaic_0001>
module attributes {stable_mosaic.version = 11 : i64} {
  func.func @kernel(%arg0: memref<64x32xf32, #tpu.memory_space<vmem>>, %arg1: memref<32x128xf32, #tpu.memory_space<vmem>>, %arg2: memref<32x128xf32, #tpu.memory_space<vmem>>, %arg3: memref<1x128xf32, #tpu.memory_space<vmem>>, %arg4: memref<32x128xf32, #tpu.memory_space<vmem>>, %arg5: memref<32x128xf32, #tpu.memory_space<vmem>>, %arg6: memref<1x128xf32, #tpu.memory_space<vmem>>, %arg7: memref<2x8x32xf32, #tpu.memory_space<vmem>>, %arg8: memref<2x8x32xf32, #tpu.memory_space<vmem>>, %arg9: memref<64x128xf32, #tpu.memory_space<vmem>>, %arg10: memref<64x32xf32, #tpu.memory_space<vmem>>) attributes {dimension_semantics = [], scalar_prefetch = 0 : i64, scratch_operands = 2 : i64, tpu.core_type = #tpu.core_type<tc>} {
    %c0 = arith.constant 0 : index
    %c0_0 = arith.constant 0 : index
    %0 = vector.load %arg0[%c0, %c0_0] : memref<64x32xf32, #tpu.memory_space<vmem>>, vector<64x32xf32>
    %c0_1 = arith.constant 0 : index
    %c0_2 = arith.constant 0 : index
    %1 = vector.load %arg1[%c0_1, %c0_2] : memref<32x128xf32, #tpu.memory_space<vmem>>, vector<32x128xf32>
    %cst = arith.constant dense<0.000000e+00> : vector<64x128xf32>
    %2 = tpu.matmul %0, %1, %cst {dimension_numbers = #tpu.dot_dimension_numbers<[1], [0], [0], [1], [0, 0, 1, 1], [], []>} : vector<64x32xf32>, vector<32x128xf32>, vector<64x128xf32> -> vector<64x128xf32>
    %c0_3 = arith.constant 0 : index
    %c0_4 = arith.constant 0 : index
    %3 = vector.load %arg3[%c0_3, %c0_4] : memref<1x128xf32, #tpu.memory_space<vmem>>, vector<1x128xf32>
    %4 = vector.broadcast %3 : vector<1x128xf32> to vector<64x128xf32>
    %5 = arith.addf %2, %4 : vector<64x128xf32>
    %c0_5 = arith.constant 0 : index
    %c0_6 = arith.constant 0 : index
    %6 = vector.load %arg9[%c0_5, %c0_6] : memref<64x128xf32, #tpu.memory_space<vmem>>, vector<64x128xf32>
    tpu.vector_store %arg9[%c0_5, %c0_6], %5 {strides = array<i32>} : memref<64x128xf32, #tpu.memory_space<vmem>>, vector<64x128xf32>,
    %cst_7 = arith.constant 0.000000e+00 : f32
    %7 = vector.broadcast %cst_7 : f32 to vector<8x32xf32>
    %cst_8 = arith.constant 0.000000e+00 : f32
    %8 = vector.broadcast %cst_8 : f32 to vector<8x32xf32>
    %c0_i32 = arith.constant 0 : i32
    %c8_i32 = arith.constant 8 : i32
    %9 = arith.muli %c0_i32, %c8_i32 : i32
    %10 = tpu.assume_multiple %9, 8 : i32
    %11 = arith.index_cast %10 : i32 to index
    %c0_9 = arith.constant 0 : index
    %12 = vector.load %arg9[%11, %c0_9] : memref<64x128xf32, #tpu.memory_space<vmem>>, vector<8x128xf32>
    %c0_10 = arith.constant 0 : index
    %c0_11 = arith.constant 0 : index
    %13 = vector.load %arg2[%c0_10, %c0_11] : memref<32x128xf32, #tpu.memory_space<vmem>>, vector<32x128xf32>
    %cst_12 = arith.constant dense<0.000000e+00> : vector<8x128xf32>
    %14 = tpu.matmul %7, %13, %cst_12 {dimension_numbers = #tpu.dot_dimension_numbers<[1], [0], [0], [1], [0, 0, 1, 1], [], []>} : vector<8x32xf32>, vector<32x128xf32>, vector<8x128xf32> -> vector<8x128xf32>
    %15 = arith.addf %12, %14 : vector<8x128xf32>
    %16 = vector.extract_strided_slice %15 {offsets = [0, 0], sizes = [8, 32], strides = [1, 1]} : vector<8x128xf32> to vector<8x32xf32>
    %17 = arith.negf %16 : vector<8x32xf32>
    %18 = math.exp %17 : vector<8x32xf32>
    %cst_13 = arith.constant 1.000000e+00 : f32
    %19 = vector.broadcast %cst_13 : f32 to vector<8x32xf32>
    %20 = arith.addf %19, %18 : vector<8x32xf32>
    %21 = arith.divf %19, %20 : vector<8x32xf32>
    %22 = vector.extract_strided_slice %15 {offsets = [0, 32], sizes = [8, 32], strides = [1, 1]} : vector<8x128xf32> to vector<8x32xf32>
    %23 = arith.negf %22 : vector<8x32xf32>
    %24 = math.exp %23 : vector<8x32xf32>
    %cst_14 = arith.constant 1.000000e+00 : f32
    %25 = vector.broadcast %cst_14 : f32 to vector<8x32xf32>
    %26 = arith.addf %25, %24 : vector<8x32xf32>
    %27 = arith.divf %25, %26 : vector<8x32xf32>
    %28 = vector.extract_strided_slice %15 {offsets = [0, 64], sizes = [8, 32], strides = [1, 1]} : vector<8x128xf32> to vector<8x32xf32>
    %29 = math.tanh %28 : vector<8x32xf32>
    %30 = vector.extract_strided_slice %15 {offsets = [0, 96], sizes = [8, 32], strides = [1, 1]} : vector<8x128xf32> to vector<8x32xf32>
    %31 = arith.negf %30 : vector<8x32xf32>
    %32 = math.exp %31 : vector<8x32xf32>
    %cst_15 = arith.constant 1.000000e+00 : f32
    %33 = vector.broadcast %cst_15 : f32 to vector<8x32xf32>
    %34 = arith.addf %33, %32 : vector<8x32xf32>
    %35 = arith.divf %33, %34 : vector<8x32xf32>
    %36 = arith.mulf %27, %8 : vector<8x32xf32>
    %37 = arith.mulf %21, %29 : vector<8x32xf32>
    %38 = arith.addf %36, %37 : vector<8x32xf32>
    %39 = math.tanh %38 : vector<8x32xf32>
    %40 = arith.mulf %35, %39 : vector<8x32xf32>
    %41 = arith.index_cast %10 : i32 to index
    %c0_16 = arith.constant 0 : index
    %42 = vector.load %arg10[%41, %c0_16] : memref<64x32xf32, #tpu.memory_space<vmem>>, vector<8x32xf32>
    tpu.vector_store %arg10[%41, %c0_16], %40 {strides = array<i32>} : memref<64x32xf32, #tpu.memory_space<vmem>>, vector<8x32xf32>,
    %c1_i32 = arith.constant 1 : i32
    %c8_i32_17 = arith.constant 8 : i32
    %43 = arith.muli %c1_i32, %c8_i32_17 : i32
    %44 = tpu.assume_multiple %43, 8 : i32
    %45 = arith.index_cast %44 : i32 to index
    %c0_18 = arith.constant 0 : index
    %46 = vector.load %arg9[%45, %c0_18] : memref<64x128xf32, #tpu.memory_space<vmem>>, vector<8x128xf32>
    %c0_19 = arith.constant 0 : index
    %c0_20 = arith.constant 0 : index
    %47 = vector.load %arg2[%c0_19, %c0_20] : memref<32x128xf32, #tpu.memory_space<vmem>>, vector<32x128xf32>
    %cst_21 = arith.constant dense<0.000000e+00> : vector<8x128xf32>
    %48 = tpu.matmul %40, %47, %cst_21 {dimension_numbers = #tpu.dot_dimension_numbers<[1], [0], [0], [1], [0, 0, 1, 1], [], []>} : vector<8x32xf32>, vector<32x128xf32>, vector<8x128xf32> -> vector<8x128xf32>
    %49 = arith.addf %46, %48 : vector<8x128xf32>
    %50 = vector.extract_strided_slice %49 {offsets = [0, 0], sizes = [8, 32], strides = [1, 1]} : vector<8x128xf32> to vector<8x32xf32>
    %51 = arith.negf %50 : vector<8x32xf32>
    %52 = math.exp %51 : vector<8x32xf32>
    %cst_22 = arith.constant 1.000000e+00 : f32
    %53 = vector.broadcast %cst_22 : f32 to vector<8x32xf32>
    %54 = arith.addf %53, %52 : vector<8x32xf32>
    %55 = arith.divf %53, %54 : vector<8x32xf32>
    %56 = vector.extract_strided_slice %49 {offsets = [0, 32], sizes = [8, 32], strides = [1, 1]} : vector<8x128xf32> to vector<8x32xf32>
    %57 = arith.negf %56 : vector<8x32xf32>
    %58 = math.exp %57 : vector<8x32xf32>
    %cst_23 = arith.constant 1.000000e+00 : f32
    %59 = vector.broadcast %cst_23 : f32 to vector<8x32xf32>
    %60 = arith.addf %59, %58 : vector<8x32xf32>
    %61 = arith.divf %59, %60 : vector<8x32xf32>
    %62 = vector.extract_strided_slice %49 {offsets = [0, 64], sizes = [8, 32], strides = [1, 1]} : vector<8x128xf32> to vector<8x32xf32>
    %63 = math.tanh %62 : vector<8x32xf32>
    %64 = vector.extract_strided_slice %49 {offsets = [0, 96], sizes = [8, 32], strides = [1, 1]} : vector<8x128xf32> to vector<8x32xf32>
    %65 = arith.negf %64 : vector<8x32xf32>
    %66 = math.exp %65 : vector<8x32xf32>
    %cst_24 = arith.constant 1.000000e+00 : f32
    %67 = vector.broadcast %cst_24 : f32 to vector<8x32xf32>
    %68 = arith.addf %67, %66 : vector<8x32xf32>
    %69 = arith.divf %67, %68 : vector<8x32xf32>
    %70 = arith.mulf %61, %38 : vector<8x32xf32>
    %71 = arith.mulf %55, %63 : vector<8x32xf32>
    %72 = arith.addf %70, %71 : vector<8x32xf32>
    %73 = math.tanh %72 : vector<8x32xf32>
    %74 = arith.mulf %69, %73 : vector<8x32xf32>
    %75 = arith.index_cast %44 : i32 to index
    %c0_25 = arith.constant 0 : index
    %76 = vector.load %arg10[%75, %c0_25] : memref<64x32xf32, #tpu.memory_space<vmem>>, vector<8x32xf32>
    tpu.vector_store %arg10[%75, %c0_25], %74 {strides = array<i32>} : memref<64x32xf32, #tpu.memory_space<vmem>>, vector<8x32xf32>,
    %c2_i32 = arith.constant 2 : i32
    %c8_i32_26 = arith.constant 8 : i32
    %77 = arith.muli %c2_i32, %c8_i32_26 : i32
    %78 = tpu.assume_multiple %77, 8 : i32
    %79 = arith.index_cast %78 : i32 to index
    %c0_27 = arith.constant 0 : index
    %80 = vector.load %arg9[%79, %c0_27] : memref<64x128xf32, #tpu.memory_space<vmem>>, vector<8x128xf32>
    %c0_28 = arith.constant 0 : index
    %c0_29 = arith.constant 0 : index
    %81 = vector.load %arg2[%c0_28, %c0_29] : memref<32x128xf32, #tpu.memory_space<vmem>>, vector<32x128xf32>
    %cst_30 = arith.constant dense<0.000000e+00> : vector<8x128xf32>
    %82 = tpu.matmul %74, %81, %cst_30 {dimension_numbers = #tpu.dot_dimension_numbers<[1], [0], [0], [1], [0, 0, 1, 1], [], []>} : vector<8x32xf32>, vector<32x128xf32>, vector<8x128xf32> -> vector<8x128xf32>
    %83 = arith.addf %80, %82 : vector<8x128xf32>
    %84 = vector.extract_strided_slice %83 {offsets = [0, 0], sizes = [8, 32], strides = [1, 1]} : vector<8x128xf32> to vector<8x32xf32>
    %85 = arith.negf %84 : vector<8x32xf32>
    %86 = math.exp %85 : vector<8x32xf32>
    %cst_31 = arith.constant 1.000000e+00 : f32
    %87 = vector.broadcast %cst_31 : f32 to vector<8x32xf32>
    %88 = arith.addf %87, %86 : vector<8x32xf32>
    %89 = arith.divf %87, %88 : vector<8x32xf32>
    %90 = vector.extract_strided_slice %83 {offsets = [0, 32], sizes = [8, 32], strides = [1, 1]} : vector<8x128xf32> to vector<8x32xf32>
    %91 = arith.negf %90 : vector<8x32xf32>
    %92 = math.exp %91 : vector<8x32xf32>
    %cst_32 = arith.constant 1.000000e+00 : f32
    %93 = vector.broadcast %cst_32 : f32 to vector<8x32xf32>
    %94 = arith.addf %93, %92 : vector<8x32xf32>
    %95 = arith.divf %93, %94 : vector<8x32xf32>
    %96 = vector.extract_strided_slice %83 {offsets = [0, 64], sizes = [8, 32], strides = [1, 1]} : vector<8x128xf32> to vector<8x32xf32>
    %97 = math.tanh %96 : vector<8x32xf32>
    %98 = vector.extract_strided_slice %83 {offsets = [0, 96], sizes = [8, 32], strides = [1, 1]} : vector<8x128xf32> to vector<8x32xf32>
    %99 = arith.negf %98 : vector<8x32xf32>
    %100 = math.exp %99 : vector<8x32xf32>
    %cst_33 = arith.constant 1.000000e+00 : f32
    %101 = vector.broadcast %cst_33 : f32 to vector<8x32xf32>
    %102 = arith.addf %101, %100 : vector<8x32xf32>
    %103 = arith.divf %101, %102 : vector<8x32xf32>
    %104 = arith.mulf %95, %72 : vector<8x32xf32>
    %105 = arith.mulf %89, %97 : vector<8x32xf32>
    %106 = arith.addf %104, %105 : vector<8x32xf32>
    %107 = math.tanh %106 : vector<8x32xf32>
    %108 = arith.mulf %103, %107 : vector<8x32xf32>
    %109 = arith.index_cast %78 : i32 to index
    %c0_34 = arith.constant 0 : index
    %110 = vector.load %arg10[%109, %c0_34] : memref<64x32xf32, #tpu.memory_space<vmem>>, vector<8x32xf32>
    tpu.vector_store %arg10[%109, %c0_34], %108 {strides = array<i32>} : memref<64x32xf32, #tpu.memory_space<vmem>>, vector<8x32xf32>,
    %c3_i32 = arith.constant 3 : i32
    %c8_i32_35 = arith.constant 8 : i32
    %111 = arith.muli %c3_i32, %c8_i32_35 : i32
    %112 = tpu.assume_multiple %111, 8 : i32
    %113 = arith.index_cast %112 : i32 to index
    %c0_36 = arith.constant 0 : index
    %114 = vector.load %arg9[%113, %c0_36] : memref<64x128xf32, #tpu.memory_space<vmem>>, vector<8x128xf32>
    %c0_37 = arith.constant 0 : index
    %c0_38 = arith.constant 0 : index
    %115 = vector.load %arg2[%c0_37, %c0_38] : memref<32x128xf32, #tpu.memory_space<vmem>>, vector<32x128xf32>
    %cst_39 = arith.constant dense<0.000000e+00> : vector<8x128xf32>
    %116 = tpu.matmul %108, %115, %cst_39 {dimension_numbers = #tpu.dot_dimension_numbers<[1], [0], [0], [1], [0, 0, 1, 1], [], []>} : vector<8x32xf32>, vector<32x128xf32>, vector<8x128xf32> -> vector<8x128xf32>
    %117 = arith.addf %114, %116 : vector<8x128xf32>
    %118 = vector.extract_strided_slice %117 {offsets = [0, 0], sizes = [8, 32], strides = [1, 1]} : vector<8x128xf32> to vector<8x32xf32>
    %119 = arith.negf %118 : vector<8x32xf32>
    %120 = math.exp %119 : vector<8x32xf32>
    %cst_40 = arith.constant 1.000000e+00 : f32
    %121 = vector.broadcast %cst_40 : f32 to vector<8x32xf32>
    %122 = arith.addf %121, %120 : vector<8x32xf32>
    %123 = arith.divf %121, %122 : vector<8x32xf32>
    %124 = vector.extract_strided_slice %117 {offsets = [0, 32], sizes = [8, 32], strides = [1, 1]} : vector<8x128xf32> to vector<8x32xf32>
    %125 = arith.negf %124 : vector<8x32xf32>
    %126 = math.exp %125 : vector<8x32xf32>
    %cst_41 = arith.constant 1.000000e+00 : f32
    %127 = vector.broadcast %cst_41 : f32 to vector<8x32xf32>
    %128 = arith.addf %127, %126 : vector<8x32xf32>
    %129 = arith.divf %127, %128 : vector<8x32xf32>
    %130 = vector.extract_strided_slice %117 {offsets = [0, 64], sizes = [8, 32], strides = [1, 1]} : vector<8x128xf32> to vector<8x32xf32>
    %131 = math.tanh %130 : vector<8x32xf32>
    %132 = vector.extract_strided_slice %117 {offsets = [0, 96], sizes = [8, 32], strides = [1, 1]} : vector<8x128xf32> to vector<8x32xf32>
    %133 = arith.negf %132 : vector<8x32xf32>
    %134 = math.exp %133 : vector<8x32xf32>
    %cst_42 = arith.constant 1.000000e+00 : f32
    %135 = vector.broadcast %cst_42 : f32 to vector<8x32xf32>
    %136 = arith.addf %135, %134 : vector<8x32xf32>
    %137 = arith.divf %135, %136 : vector<8x32xf32>
    %138 = arith.mulf %129, %106 : vector<8x32xf32>
    %139 = arith.mulf %123, %131 : vector<8x32xf32>
    %140 = arith.addf %138, %139 : vector<8x32xf32>
    %141 = math.tanh %140 : vector<8x32xf32>
    %142 = arith.mulf %137, %141 : vector<8x32xf32>
    %143 = arith.index_cast %112 : i32 to index
    %c0_43 = arith.constant 0 : index
    %144 = vector.load %arg10[%143, %c0_43] : memref<64x32xf32, #tpu.memory_space<vmem>>, vector<8x32xf32>
    tpu.vector_store %arg10[%143, %c0_43], %142 {strides = array<i32>} : memref<64x32xf32, #tpu.memory_space<vmem>>, vector<8x32xf32>,
    %c4_i32 = arith.constant 4 : i32
    %c8_i32_44 = arith.constant 8 : i32
    %145 = arith.muli %c4_i32, %c8_i32_44 : i32
    %146 = tpu.assume_multiple %145, 8 : i32
    %147 = arith.index_cast %146 : i32 to index
    %c0_45 = arith.constant 0 : index
    %148 = vector.load %arg9[%147, %c0_45] : memref<64x128xf32, #tpu.memory_space<vmem>>, vector<8x128xf32>
    %c0_46 = arith.constant 0 : index
    %c0_47 = arith.constant 0 : index
    %149 = vector.load %arg2[%c0_46, %c0_47] : memref<32x128xf32, #tpu.memory_space<vmem>>, vector<32x128xf32>
    %cst_48 = arith.constant dense<0.000000e+00> : vector<8x128xf32>
    %150 = tpu.matmul %142, %149, %cst_48 {dimension_numbers = #tpu.dot_dimension_numbers<[1], [0], [0], [1], [0, 0, 1, 1], [], []>} : vector<8x32xf32>, vector<32x128xf32>, vector<8x128xf32> -> vector<8x128xf32>
    %151 = arith.addf %148, %150 : vector<8x128xf32>
    %152 = vector.extract_strided_slice %151 {offsets = [0, 0], sizes = [8, 32], strides = [1, 1]} : vector<8x128xf32> to vector<8x32xf32>
    %153 = arith.negf %152 : vector<8x32xf32>
    %154 = math.exp %153 : vector<8x32xf32>
    %cst_49 = arith.constant 1.000000e+00 : f32
    %155 = vector.broadcast %cst_49 : f32 to vector<8x32xf32>
    %156 = arith.addf %155, %154 : vector<8x32xf32>
    %157 = arith.divf %155, %156 : vector<8x32xf32>
    %158 = vector.extract_strided_slice %151 {offsets = [0, 32], sizes = [8, 32], strides = [1, 1]} : vector<8x128xf32> to vector<8x32xf32>
    %159 = arith.negf %158 : vector<8x32xf32>
    %160 = math.exp %159 : vector<8x32xf32>
    %cst_50 = arith.constant 1.000000e+00 : f32
    %161 = vector.broadcast %cst_50 : f32 to vector<8x32xf32>
    %162 = arith.addf %161, %160 : vector<8x32xf32>
    %163 = arith.divf %161, %162 : vector<8x32xf32>
    %164 = vector.extract_strided_slice %151 {offsets = [0, 64], sizes = [8, 32], strides = [1, 1]} : vector<8x128xf32> to vector<8x32xf32>
    %165 = math.tanh %164 : vector<8x32xf32>
    %166 = vector.extract_strided_slice %151 {offsets = [0, 96], sizes = [8, 32], strides = [1, 1]} : vector<8x128xf32> to vector<8x32xf32>
    %167 = arith.negf %166 : vector<8x32xf32>
    %168 = math.exp %167 : vector<8x32xf32>
    %cst_51 = arith.constant 1.000000e+00 : f32
    %169 = vector.broadcast %cst_51 : f32 to vector<8x32xf32>
    %170 = arith.addf %169, %168 : vector<8x32xf32>
    %171 = arith.divf %169, %170 : vector<8x32xf32>
    %172 = arith.mulf %163, %140 : vector<8x32xf32>
    %173 = arith.mulf %157, %165 : vector<8x32xf32>
    %174 = arith.addf %172, %173 : vector<8x32xf32>
    %175 = math.tanh %174 : vector<8x32xf32>
    %176 = arith.mulf %171, %175 : vector<8x32xf32>
    %177 = arith.index_cast %146 : i32 to index
    %c0_52 = arith.constant 0 : index
    %178 = vector.load %arg10[%177, %c0_52] : memref<64x32xf32, #tpu.memory_space<vmem>>, vector<8x32xf32>
    tpu.vector_store %arg10[%177, %c0_52], %176 {strides = array<i32>} : memref<64x32xf32, #tpu.memory_space<vmem>>, vector<8x32xf32>,
    %c5_i32 = arith.constant 5 : i32
    %c8_i32_53 = arith.constant 8 : i32
    %179 = arith.muli %c5_i32, %c8_i32_53 : i32
    %180 = tpu.assume_multiple %179, 8 : i32
    %181 = arith.index_cast %180 : i32 to index
    %c0_54 = arith.constant 0 : index
    %182 = vector.load %arg9[%181, %c0_54] : memref<64x128xf32, #tpu.memory_space<vmem>>, vector<8x128xf32>
    %c0_55 = arith.constant 0 : index
    %c0_56 = arith.constant 0 : index
    %183 = vector.load %arg2[%c0_55, %c0_56] : memref<32x128xf32, #tpu.memory_space<vmem>>, vector<32x128xf32>
    %cst_57 = arith.constant dense<0.000000e+00> : vector<8x128xf32>
    %184 = tpu.matmul %176, %183, %cst_57 {dimension_numbers = #tpu.dot_dimension_numbers<[1], [0], [0], [1], [0, 0, 1, 1], [], []>} : vector<8x32xf32>, vector<32x128xf32>, vector<8x128xf32> -> vector<8x128xf32>
    %185 = arith.addf %182, %184 : vector<8x128xf32>
    %186 = vector.extract_strided_slice %185 {offsets = [0, 0], sizes = [8, 32], strides = [1, 1]} : vector<8x128xf32> to vector<8x32xf32>
    %187 = arith.negf %186 : vector<8x32xf32>
    %188 = math.exp %187 : vector<8x32xf32>
    %cst_58 = arith.constant 1.000000e+00 : f32
    %189 = vector.broadcast %cst_58 : f32 to vector<8x32xf32>
    %190 = arith.addf %189, %188 : vector<8x32xf32>
    %191 = arith.divf %189, %190 : vector<8x32xf32>
    %192 = vector.extract_strided_slice %185 {offsets = [0, 32], sizes = [8, 32], strides = [1, 1]} : vector<8x128xf32> to vector<8x32xf32>
    %193 = arith.negf %192 : vector<8x32xf32>
    %194 = math.exp %193 : vector<8x32xf32>
    %cst_59 = arith.constant 1.000000e+00 : f32
    %195 = vector.broadcast %cst_59 : f32 to vector<8x32xf32>
    %196 = arith.addf %195, %194 : vector<8x32xf32>
    %197 = arith.divf %195, %196 : vector<8x32xf32>
    %198 = vector.extract_strided_slice %185 {offsets = [0, 64], sizes = [8, 32], strides = [1, 1]} : vector<8x128xf32> to vector<8x32xf32>
    %199 = math.tanh %198 : vector<8x32xf32>
    %200 = vector.extract_strided_slice %185 {offsets = [0, 96], sizes = [8, 32], strides = [1, 1]} : vector<8x128xf32> to vector<8x32xf32>
    %201 = arith.negf %200 : vector<8x32xf32>
    %202 = math.exp %201 : vector<8x32xf32>
    %cst_60 = arith.constant 1.000000e+00 : f32
    %203 = vector.broadcast %cst_60 : f32 to vector<8x32xf32>
    %204 = arith.addf %203, %202 : vector<8x32xf32>
    %205 = arith.divf %203, %204 : vector<8x32xf32>
    %206 = arith.mulf %197, %174 : vector<8x32xf32>
    %207 = arith.mulf %191, %199 : vector<8x32xf32>
    %208 = arith.addf %206, %207 : vector<8x32xf32>
    %209 = math.tanh %208 : vector<8x32xf32>
    %210 = arith.mulf %205, %209 : vector<8x32xf32>
    %211 = arith.index_cast %180 : i32 to index
    %c0_61 = arith.constant 0 : index
    %212 = vector.load %arg10[%211, %c0_61] : memref<64x32xf32, #tpu.memory_space<vmem>>, vector<8x32xf32>
    tpu.vector_store %arg10[%211, %c0_61], %210 {strides = array<i32>} : memref<64x32xf32, #tpu.memory_space<vmem>>, vector<8x32xf32>,
    %c6_i32 = arith.constant 6 : i32
    %c8_i32_62 = arith.constant 8 : i32
    %213 = arith.muli %c6_i32, %c8_i32_62 : i32
    %214 = tpu.assume_multiple %213, 8 : i32
    %215 = arith.index_cast %214 : i32 to index
    %c0_63 = arith.constant 0 : index
    %216 = vector.load %arg9[%215, %c0_63] : memref<64x128xf32, #tpu.memory_space<vmem>>, vector<8x128xf32>
    %c0_64 = arith.constant 0 : index
    %c0_65 = arith.constant 0 : index
    %217 = vector.load %arg2[%c0_64, %c0_65] : memref<32x128xf32, #tpu.memory_space<vmem>>, vector<32x128xf32>
    %cst_66 = arith.constant dense<0.000000e+00> : vector<8x128xf32>
    %218 = tpu.matmul %210, %217, %cst_66 {dimension_numbers = #tpu.dot_dimension_numbers<[1], [0], [0], [1], [0, 0, 1, 1], [], []>} : vector<8x32xf32>, vector<32x128xf32>, vector<8x128xf32> -> vector<8x128xf32>
    %219 = arith.addf %216, %218 : vector<8x128xf32>
    %220 = vector.extract_strided_slice %219 {offsets = [0, 0], sizes = [8, 32], strides = [1, 1]} : vector<8x128xf32> to vector<8x32xf32>
    %221 = arith.negf %220 : vector<8x32xf32>
    %222 = math.exp %221 : vector<8x32xf32>
    %cst_67 = arith.constant 1.000000e+00 : f32
    %223 = vector.broadcast %cst_67 : f32 to vector<8x32xf32>
    %224 = arith.addf %223, %222 : vector<8x32xf32>
    %225 = arith.divf %223, %224 : vector<8x32xf32>
    %226 = vector.extract_strided_slice %219 {offsets = [0, 32], sizes = [8, 32], strides = [1, 1]} : vector<8x128xf32> to vector<8x32xf32>
    %227 = arith.negf %226 : vector<8x32xf32>
    %228 = math.exp %227 : vector<8x32xf32>
    %cst_68 = arith.constant 1.000000e+00 : f32
    %229 = vector.broadcast %cst_68 : f32 to vector<8x32xf32>
    %230 = arith.addf %229, %228 : vector<8x32xf32>
    %231 = arith.divf %229, %230 : vector<8x32xf32>
    %232 = vector.extract_strided_slice %219 {offsets = [0, 64], sizes = [8, 32], strides = [1, 1]} : vector<8x128xf32> to vector<8x32xf32>
    %233 = math.tanh %232 : vector<8x32xf32>
    %234 = vector.extract_strided_slice %219 {offsets = [0, 96], sizes = [8, 32], strides = [1, 1]} : vector<8x128xf32> to vector<8x32xf32>
    %235 = arith.negf %234 : vector<8x32xf32>
    %236 = math.exp %235 : vector<8x32xf32>
    %cst_69 = arith.constant 1.000000e+00 : f32
    %237 = vector.broadcast %cst_69 : f32 to vector<8x32xf32>
    %238 = arith.addf %237, %236 : vector<8x32xf32>
    %239 = arith.divf %237, %238 : vector<8x32xf32>
    %240 = arith.mulf %231, %208 : vector<8x32xf32>
    %241 = arith.mulf %225, %233 : vector<8x32xf32>
    %242 = arith.addf %240, %241 : vector<8x32xf32>
    %243 = math.tanh %242 : vector<8x32xf32>
    %244 = arith.mulf %239, %243 : vector<8x32xf32>
    %245 = arith.index_cast %214 : i32 to index
    %c0_70 = arith.constant 0 : index
    %246 = vector.load %arg10[%245, %c0_70] : memref<64x32xf32, #tpu.memory_space<vmem>>, vector<8x32xf32>
    tpu.vector_store %arg10[%245, %c0_70], %244 {strides = array<i32>} : memref<64x32xf32, #tpu.memory_space<vmem>>, vector<8x32xf32>,
    %c7_i32 = arith.constant 7 : i32
    %c8_i32_71 = arith.constant 8 : i32
    %247 = arith.muli %c7_i32, %c8_i32_71 : i32
    %248 = tpu.assume_multiple %247, 8 : i32
    %249 = arith.index_cast %248 : i32 to index
    %c0_72 = arith.constant 0 : index
    %250 = vector.load %arg9[%249, %c0_72] : memref<64x128xf32, #tpu.memory_space<vmem>>, vector<8x128xf32>
    %c0_73 = arith.constant 0 : index
    %c0_74 = arith.constant 0 : index
    %251 = vector.load %arg2[%c0_73, %c0_74] : memref<32x128xf32, #tpu.memory_space<vmem>>, vector<32x128xf32>
    %cst_75 = arith.constant dense<0.000000e+00> : vector<8x128xf32>
    %252 = tpu.matmul %244, %251, %cst_75 {dimension_numbers = #tpu.dot_dimension_numbers<[1], [0], [0], [1], [0, 0, 1, 1], [], []>} : vector<8x32xf32>, vector<32x128xf32>, vector<8x128xf32> -> vector<8x128xf32>
    %253 = arith.addf %250, %252 : vector<8x128xf32>
    %254 = vector.extract_strided_slice %253 {offsets = [0, 0], sizes = [8, 32], strides = [1, 1]} : vector<8x128xf32> to vector<8x32xf32>
    %255 = arith.negf %254 : vector<8x32xf32>
    %256 = math.exp %255 : vector<8x32xf32>
    %cst_76 = arith.constant 1.000000e+00 : f32
    %257 = vector.broadcast %cst_76 : f32 to vector<8x32xf32>
    %258 = arith.addf %257, %256 : vector<8x32xf32>
    %259 = arith.divf %257, %258 : vector<8x32xf32>
    %260 = vector.extract_strided_slice %253 {offsets = [0, 32], sizes = [8, 32], strides = [1, 1]} : vector<8x128xf32> to vector<8x32xf32>
    %261 = arith.negf %260 : vector<8x32xf32>
    %262 = math.exp %261 : vector<8x32xf32>
    %cst_77 = arith.constant 1.000000e+00 : f32
    %263 = vector.broadcast %cst_77 : f32 to vector<8x32xf32>
    %264 = arith.addf %263, %262 : vector<8x32xf32>
    %265 = arith.divf %263, %264 : vector<8x32xf32>
    %266 = vector.extract_strided_slice %253 {offsets = [0, 64], sizes = [8, 32], strides = [1, 1]} : vector<8x128xf32> to vector<8x32xf32>
    %267 = math.tanh %266 : vector<8x32xf32>
    %268 = vector.extract_strided_slice %253 {offsets = [0, 96], sizes = [8, 32], strides = [1, 1]} : vector<8x128xf32> to vector<8x32xf32>
    %269 = arith.negf %268 : vector<8x32xf32>
    %270 = math.exp %269 : vector<8x32xf32>
    %cst_78 = arith.constant 1.000000e+00 : f32
    %271 = vector.broadcast %cst_78 : f32 to vector<8x32xf32>
    %272 = arith.addf %271, %270 : vector<8x32xf32>
    %273 = arith.divf %271, %272 : vector<8x32xf32>
    %274 = arith.mulf %265, %242 : vector<8x32xf32>
    %275 = arith.mulf %259, %267 : vector<8x32xf32>
    %276 = arith.addf %274, %275 : vector<8x32xf32>
    %277 = math.tanh %276 : vector<8x32xf32>
    %278 = arith.mulf %273, %277 : vector<8x32xf32>
    %279 = arith.index_cast %248 : i32 to index
    %c0_79 = arith.constant 0 : index
    %280 = vector.load %arg10[%279, %c0_79] : memref<64x32xf32, #tpu.memory_space<vmem>>, vector<8x32xf32>
    tpu.vector_store %arg10[%279, %c0_79], %278 {strides = array<i32>} : memref<64x32xf32, #tpu.memory_space<vmem>>, vector<8x32xf32>,
    %c8_i32_80 = arith.constant 8 : i32
    %c0_81 = arith.constant 0 : index
    %c0_82 = arith.constant 0 : index
    %c0_83 = arith.constant 0 : index
    %281 = vector.load %arg7[%c0_81, %c0_82, %c0_83] : memref<2x8x32xf32, #tpu.memory_space<vmem>>, vector<1x8x32xf32>
    %282 = vector.shape_cast %281 : vector<1x8x32xf32> to vector<8x32xf32>
    %283 = vector.shape_cast %278 : vector<8x32xf32> to vector<1x8x32xf32>
    tpu.vector_store %arg7[%c0_81, %c0_82, %c0_83], %283 {strides = array<i32>} : memref<2x8x32xf32, #tpu.memory_space<vmem>>, vector<1x8x32xf32>,
    %c0_84 = arith.constant 0 : index
    %c0_85 = arith.constant 0 : index
    %c0_86 = arith.constant 0 : index
    %284 = vector.load %arg8[%c0_84, %c0_85, %c0_86] : memref<2x8x32xf32, #tpu.memory_space<vmem>>, vector<1x8x32xf32>
    %285 = vector.shape_cast %284 : vector<1x8x32xf32> to vector<8x32xf32>
    %286 = vector.shape_cast %276 : vector<8x32xf32> to vector<1x8x32xf32>
    tpu.vector_store %arg8[%c0_84, %c0_85, %c0_86], %286 {strides = array<i32>} : memref<2x8x32xf32, #tpu.memory_space<vmem>>, vector<1x8x32xf32>,
    %c0_87 = arith.constant 0 : index
    %c0_88 = arith.constant 0 : index
    %287 = vector.load %arg10[%c0_87, %c0_88] : memref<64x32xf32, #tpu.memory_space<vmem>>, vector<64x32xf32>
    %c0_89 = arith.constant 0 : index
    %c0_90 = arith.constant 0 : index
    %288 = vector.load %arg4[%c0_89, %c0_90] : memref<32x128xf32, #tpu.memory_space<vmem>>, vector<32x128xf32>
    %cst_91 = arith.constant dense<0.000000e+00> : vector<64x128xf32>
    %289 = tpu.matmul %287, %288, %cst_91 {dimension_numbers = #tpu.dot_dimension_numbers<[1], [0], [0], [1], [0, 0, 1, 1], [], []>} : vector<64x32xf32>, vector<32x128xf32>, vector<64x128xf32> -> vector<64x128xf32>
    %c0_92 = arith.constant 0 : index
    %c0_93 = arith.constant 0 : index
    %290 = vector.load %arg6[%c0_92, %c0_93] : memref<1x128xf32, #tpu.memory_space<vmem>>, vector<1x128xf32>
    %291 = vector.broadcast %290 : vector<1x128xf32> to vector<64x128xf32>
    %292 = arith.addf %289, %291 : vector<64x128xf32>
    %c0_94 = arith.constant 0 : index
    %c0_95 = arith.constant 0 : index
    %293 = vector.load %arg9[%c0_94, %c0_95] : memref<64x128xf32, #tpu.memory_space<vmem>>, vector<64x128xf32>
    tpu.vector_store %arg9[%c0_94, %c0_95], %292 {strides = array<i32>} : memref<64x128xf32, #tpu.memory_space<vmem>>, vector<64x128xf32>,
    %cst_96 = arith.constant 0.000000e+00 : f32
    %294 = vector.broadcast %cst_96 : f32 to vector<8x32xf32>
    %cst_97 = arith.constant 0.000000e+00 : f32
    %295 = vector.broadcast %cst_97 : f32 to vector<8x32xf32>
    %c0_i32_98 = arith.constant 0 : i32
    %c8_i32_99 = arith.constant 8 : i32
    %296 = arith.muli %c0_i32_98, %c8_i32_99 : i32
    %297 = tpu.assume_multiple %296, 8 : i32
    %298 = arith.index_cast %297 : i32 to index
    %c0_100 = arith.constant 0 : index
    %299 = vector.load %arg9[%298, %c0_100] : memref<64x128xf32, #tpu.memory_space<vmem>>, vector<8x128xf32>
    %c0_101 = arith.constant 0 : index
    %c0_102 = arith.constant 0 : index
    %300 = vector.load %arg5[%c0_101, %c0_102] : memref<32x128xf32, #tpu.memory_space<vmem>>, vector<32x128xf32>
    %cst_103 = arith.constant dense<0.000000e+00> : vector<8x128xf32>
    %301 = tpu.matmul %294, %300, %cst_103 {dimension_numbers = #tpu.dot_dimension_numbers<[1], [0], [0], [1], [0, 0, 1, 1], [], []>} : vector<8x32xf32>, vector<32x128xf32>, vector<8x128xf32> -> vector<8x128xf32>
    %302 = arith.addf %299, %301 : vector<8x128xf32>
    %303 = vector.extract_strided_slice %302 {offsets = [0, 0], sizes = [8, 32], strides = [1, 1]} : vector<8x128xf32> to vector<8x32xf32>
    %304 = arith.negf %303 : vector<8x32xf32>
    %305 = math.exp %304 : vector<8x32xf32>
    %cst_104 = arith.constant 1.000000e+00 : f32
    %306 = vector.broadcast %cst_104 : f32 to vector<8x32xf32>
    %307 = arith.addf %306, %305 : vector<8x32xf32>
    %308 = arith.divf %306, %307 : vector<8x32xf32>
    %309 = vector.extract_strided_slice %302 {offsets = [0, 32], sizes = [8, 32], strides = [1, 1]} : vector<8x128xf32> to vector<8x32xf32>
    %310 = arith.negf %309 : vector<8x32xf32>
    %311 = math.exp %310 : vector<8x32xf32>
    %cst_105 = arith.constant 1.000000e+00 : f32
    %312 = vector.broadcast %cst_105 : f32 to vector<8x32xf32>
    %313 = arith.addf %312, %311 : vector<8x32xf32>
    %314 = arith.divf %312, %313 : vector<8x32xf32>
    %315 = vector.extract_strided_slice %302 {offsets = [0, 64], sizes = [8, 32], strides = [1, 1]} : vector<8x128xf32> to vector<8x32xf32>
    %316 = math.tanh %315 : vector<8x32xf32>
    %317 = vector.extract_strided_slice %302 {offsets = [0, 96], sizes = [8, 32], strides = [1, 1]} : vector<8x128xf32> to vector<8x32xf32>
    %318 = arith.negf %317 : vector<8x32xf32>
    %319 = math.exp %318 : vector<8x32xf32>
    %cst_106 = arith.constant 1.000000e+00 : f32
    %320 = vector.broadcast %cst_106 : f32 to vector<8x32xf32>
    %321 = arith.addf %320, %319 : vector<8x32xf32>
    %322 = arith.divf %320, %321 : vector<8x32xf32>
    %323 = arith.mulf %314, %295 : vector<8x32xf32>
    %324 = arith.mulf %308, %316 : vector<8x32xf32>
    %325 = arith.addf %323, %324 : vector<8x32xf32>
    %326 = math.tanh %325 : vector<8x32xf32>
    %327 = arith.mulf %322, %326 : vector<8x32xf32>
    %c1_i32_107 = arith.constant 1 : i32
    %c8_i32_108 = arith.constant 8 : i32
    %328 = arith.muli %c1_i32_107, %c8_i32_108 : i32
    %329 = tpu.assume_multiple %328, 8 : i32
    %330 = arith.index_cast %329 : i32 to index
    %c0_109 = arith.constant 0 : index
    %331 = vector.load %arg9[%330, %c0_109] : memref<64x128xf32, #tpu.memory_space<vmem>>, vector<8x128xf32>
    %c0_110 = arith.constant 0 : index
    %c0_111 = arith.constant 0 : index
    %332 = vector.load %arg5[%c0_110, %c0_111] : memref<32x128xf32, #tpu.memory_space<vmem>>, vector<32x128xf32>
    %cst_112 = arith.constant dense<0.000000e+00> : vector<8x128xf32>
    %333 = tpu.matmul %327, %332, %cst_112 {dimension_numbers = #tpu.dot_dimension_numbers<[1], [0], [0], [1], [0, 0, 1, 1], [], []>} : vector<8x32xf32>, vector<32x128xf32>, vector<8x128xf32> -> vector<8x128xf32>
    %334 = arith.addf %331, %333 : vector<8x128xf32>
    %335 = vector.extract_strided_slice %334 {offsets = [0, 0], sizes = [8, 32], strides = [1, 1]} : vector<8x128xf32> to vector<8x32xf32>
    %336 = arith.negf %335 : vector<8x32xf32>
    %337 = math.exp %336 : vector<8x32xf32>
    %cst_113 = arith.constant 1.000000e+00 : f32
    %338 = vector.broadcast %cst_113 : f32 to vector<8x32xf32>
    %339 = arith.addf %338, %337 : vector<8x32xf32>
    %340 = arith.divf %338, %339 : vector<8x32xf32>
    %341 = vector.extract_strided_slice %334 {offsets = [0, 32], sizes = [8, 32], strides = [1, 1]} : vector<8x128xf32> to vector<8x32xf32>
    %342 = arith.negf %341 : vector<8x32xf32>
    %343 = math.exp %342 : vector<8x32xf32>
    %cst_114 = arith.constant 1.000000e+00 : f32
    %344 = vector.broadcast %cst_114 : f32 to vector<8x32xf32>
    %345 = arith.addf %344, %343 : vector<8x32xf32>
    %346 = arith.divf %344, %345 : vector<8x32xf32>
    %347 = vector.extract_strided_slice %334 {offsets = [0, 64], sizes = [8, 32], strides = [1, 1]} : vector<8x128xf32> to vector<8x32xf32>
    %348 = math.tanh %347 : vector<8x32xf32>
    %349 = vector.extract_strided_slice %334 {offsets = [0, 96], sizes = [8, 32], strides = [1, 1]} : vector<8x128xf32> to vector<8x32xf32>
    %350 = arith.negf %349 : vector<8x32xf32>
    %351 = math.exp %350 : vector<8x32xf32>
    %cst_115 = arith.constant 1.000000e+00 : f32
    %352 = vector.broadcast %cst_115 : f32 to vector<8x32xf32>
    %353 = arith.addf %352, %351 : vector<8x32xf32>
    %354 = arith.divf %352, %353 : vector<8x32xf32>
    %355 = arith.mulf %346, %325 : vector<8x32xf32>
    %356 = arith.mulf %340, %348 : vector<8x32xf32>
    %357 = arith.addf %355, %356 : vector<8x32xf32>
    %358 = math.tanh %357 : vector<8x32xf32>
    %359 = arith.mulf %354, %358 : vector<8x32xf32>
    %c2_i32_116 = arith.constant 2 : i32
    %c8_i32_117 = arith.constant 8 : i32
    %360 = arith.muli %c2_i32_116, %c8_i32_117 : i32
    %361 = tpu.assume_multiple %360, 8 : i32
    %362 = arith.index_cast %361 : i32 to index
    %c0_118 = arith.constant 0 : index
    %363 = vector.load %arg9[%362, %c0_118] : memref<64x128xf32, #tpu.memory_space<vmem>>, vector<8x128xf32>
    %c0_119 = arith.constant 0 : index
    %c0_120 = arith.constant 0 : index
    %364 = vector.load %arg5[%c0_119, %c0_120] : memref<32x128xf32, #tpu.memory_space<vmem>>, vector<32x128xf32>
    %cst_121 = arith.constant dense<0.000000e+00> : vector<8x128xf32>
    %365 = tpu.matmul %359, %364, %cst_121 {dimension_numbers = #tpu.dot_dimension_numbers<[1], [0], [0], [1], [0, 0, 1, 1], [], []>} : vector<8x32xf32>, vector<32x128xf32>, vector<8x128xf32> -> vector<8x128xf32>
    %366 = arith.addf %363, %365 : vector<8x128xf32>
    %367 = vector.extract_strided_slice %366 {offsets = [0, 0], sizes = [8, 32], strides = [1, 1]} : vector<8x128xf32> to vector<8x32xf32>
    %368 = arith.negf %367 : vector<8x32xf32>
    %369 = math.exp %368 : vector<8x32xf32>
    %cst_122 = arith.constant 1.000000e+00 : f32
    %370 = vector.broadcast %cst_122 : f32 to vector<8x32xf32>
    %371 = arith.addf %370, %369 : vector<8x32xf32>
    %372 = arith.divf %370, %371 : vector<8x32xf32>
    %373 = vector.extract_strided_slice %366 {offsets = [0, 32], sizes = [8, 32], strides = [1, 1]} : vector<8x128xf32> to vector<8x32xf32>
    %374 = arith.negf %373 : vector<8x32xf32>
    %375 = math.exp %374 : vector<8x32xf32>
    %cst_123 = arith.constant 1.000000e+00 : f32
    %376 = vector.broadcast %cst_123 : f32 to vector<8x32xf32>
    %377 = arith.addf %376, %375 : vector<8x32xf32>
    %378 = arith.divf %376, %377 : vector<8x32xf32>
    %379 = vector.extract_strided_slice %366 {offsets = [0, 64], sizes = [8, 32], strides = [1, 1]} : vector<8x128xf32> to vector<8x32xf32>
    %380 = math.tanh %379 : vector<8x32xf32>
    %381 = vector.extract_strided_slice %366 {offsets = [0, 96], sizes = [8, 32], strides = [1, 1]} : vector<8x128xf32> to vector<8x32xf32>
    %382 = arith.negf %381 : vector<8x32xf32>
    %383 = math.exp %382 : vector<8x32xf32>
    %cst_124 = arith.constant 1.000000e+00 : f32
    %384 = vector.broadcast %cst_124 : f32 to vector<8x32xf32>
    %385 = arith.addf %384, %383 : vector<8x32xf32>
    %386 = arith.divf %384, %385 : vector<8x32xf32>
    %387 = arith.mulf %378, %357 : vector<8x32xf32>
    %388 = arith.mulf %372, %380 : vector<8x32xf32>
    %389 = arith.addf %387, %388 : vector<8x32xf32>
    %390 = math.tanh %389 : vector<8x32xf32>
    %391 = arith.mulf %386, %390 : vector<8x32xf32>
    %c3_i32_125 = arith.constant 3 : i32
    %c8_i32_126 = arith.constant 8 : i32
    %392 = arith.muli %c3_i32_125, %c8_i32_126 : i32
    %393 = tpu.assume_multiple %392, 8 : i32
    %394 = arith.index_cast %393 : i32 to index
    %c0_127 = arith.constant 0 : index
    %395 = vector.load %arg9[%394, %c0_127] : memref<64x128xf32, #tpu.memory_space<vmem>>, vector<8x128xf32>
    %c0_128 = arith.constant 0 : index
    %c0_129 = arith.constant 0 : index
    %396 = vector.load %arg5[%c0_128, %c0_129] : memref<32x128xf32, #tpu.memory_space<vmem>>, vector<32x128xf32>
    %cst_130 = arith.constant dense<0.000000e+00> : vector<8x128xf32>
    %397 = tpu.matmul %391, %396, %cst_130 {dimension_numbers = #tpu.dot_dimension_numbers<[1], [0], [0], [1], [0, 0, 1, 1], [], []>} : vector<8x32xf32>, vector<32x128xf32>, vector<8x128xf32> -> vector<8x128xf32>
    %398 = arith.addf %395, %397 : vector<8x128xf32>
    %399 = vector.extract_strided_slice %398 {offsets = [0, 0], sizes = [8, 32], strides = [1, 1]} : vector<8x128xf32> to vector<8x32xf32>
    %400 = arith.negf %399 : vector<8x32xf32>
    %401 = math.exp %400 : vector<8x32xf32>
    %cst_131 = arith.constant 1.000000e+00 : f32
    %402 = vector.broadcast %cst_131 : f32 to vector<8x32xf32>
    %403 = arith.addf %402, %401 : vector<8x32xf32>
    %404 = arith.divf %402, %403 : vector<8x32xf32>
    %405 = vector.extract_strided_slice %398 {offsets = [0, 32], sizes = [8, 32], strides = [1, 1]} : vector<8x128xf32> to vector<8x32xf32>
    %406 = arith.negf %405 : vector<8x32xf32>
    %407 = math.exp %406 : vector<8x32xf32>
    %cst_132 = arith.constant 1.000000e+00 : f32
    %408 = vector.broadcast %cst_132 : f32 to vector<8x32xf32>
    %409 = arith.addf %408, %407 : vector<8x32xf32>
    %410 = arith.divf %408, %409 : vector<8x32xf32>
    %411 = vector.extract_strided_slice %398 {offsets = [0, 64], sizes = [8, 32], strides = [1, 1]} : vector<8x128xf32> to vector<8x32xf32>
    %412 = math.tanh %411 : vector<8x32xf32>
    %413 = vector.extract_strided_slice %398 {offsets = [0, 96], sizes = [8, 32], strides = [1, 1]} : vector<8x128xf32> to vector<8x32xf32>
    %414 = arith.negf %413 : vector<8x32xf32>
    %415 = math.exp %414 : vector<8x32xf32>
    %cst_133 = arith.constant 1.000000e+00 : f32
    %416 = vector.broadcast %cst_133 : f32 to vector<8x32xf32>
    %417 = arith.addf %416, %415 : vector<8x32xf32>
    %418 = arith.divf %416, %417 : vector<8x32xf32>
    %419 = arith.mulf %410, %389 : vector<8x32xf32>
    %420 = arith.mulf %404, %412 : vector<8x32xf32>
    %421 = arith.addf %419, %420 : vector<8x32xf32>
    %422 = math.tanh %421 : vector<8x32xf32>
    %423 = arith.mulf %418, %422 : vector<8x32xf32>
    %c4_i32_134 = arith.constant 4 : i32
    %c8_i32_135 = arith.constant 8 : i32
    %424 = arith.muli %c4_i32_134, %c8_i32_135 : i32
    %425 = tpu.assume_multiple %424, 8 : i32
    %426 = arith.index_cast %425 : i32 to index
    %c0_136 = arith.constant 0 : index
    %427 = vector.load %arg9[%426, %c0_136] : memref<64x128xf32, #tpu.memory_space<vmem>>, vector<8x128xf32>
    %c0_137 = arith.constant 0 : index
    %c0_138 = arith.constant 0 : index
    %428 = vector.load %arg5[%c0_137, %c0_138] : memref<32x128xf32, #tpu.memory_space<vmem>>, vector<32x128xf32>
    %cst_139 = arith.constant dense<0.000000e+00> : vector<8x128xf32>
    %429 = tpu.matmul %423, %428, %cst_139 {dimension_numbers = #tpu.dot_dimension_numbers<[1], [0], [0], [1], [0, 0, 1, 1], [], []>} : vector<8x32xf32>, vector<32x128xf32>, vector<8x128xf32> -> vector<8x128xf32>
    %430 = arith.addf %427, %429 : vector<8x128xf32>
    %431 = vector.extract_strided_slice %430 {offsets = [0, 0], sizes = [8, 32], strides = [1, 1]} : vector<8x128xf32> to vector<8x32xf32>
    %432 = arith.negf %431 : vector<8x32xf32>
    %433 = math.exp %432 : vector<8x32xf32>
    %cst_140 = arith.constant 1.000000e+00 : f32
    %434 = vector.broadcast %cst_140 : f32 to vector<8x32xf32>
    %435 = arith.addf %434, %433 : vector<8x32xf32>
    %436 = arith.divf %434, %435 : vector<8x32xf32>
    %437 = vector.extract_strided_slice %430 {offsets = [0, 32], sizes = [8, 32], strides = [1, 1]} : vector<8x128xf32> to vector<8x32xf32>
    %438 = arith.negf %437 : vector<8x32xf32>
    %439 = math.exp %438 : vector<8x32xf32>
    %cst_141 = arith.constant 1.000000e+00 : f32
    %440 = vector.broadcast %cst_141 : f32 to vector<8x32xf32>
    %441 = arith.addf %440, %439 : vector<8x32xf32>
    %442 = arith.divf %440, %441 : vector<8x32xf32>
    %443 = vector.extract_strided_slice %430 {offsets = [0, 64], sizes = [8, 32], strides = [1, 1]} : vector<8x128xf32> to vector<8x32xf32>
    %444 = math.tanh %443 : vector<8x32xf32>
    %445 = vector.extract_strided_slice %430 {offsets = [0, 96], sizes = [8, 32], strides = [1, 1]} : vector<8x128xf32> to vector<8x32xf32>
    %446 = arith.negf %445 : vector<8x32xf32>
    %447 = math.exp %446 : vector<8x32xf32>
    %cst_142 = arith.constant 1.000000e+00 : f32
    %448 = vector.broadcast %cst_142 : f32 to vector<8x32xf32>
    %449 = arith.addf %448, %447 : vector<8x32xf32>
    %450 = arith.divf %448, %449 : vector<8x32xf32>
    %451 = arith.mulf %442, %421 : vector<8x32xf32>
    %452 = arith.mulf %436, %444 : vector<8x32xf32>
    %453 = arith.addf %451, %452 : vector<8x32xf32>
    %454 = math.tanh %453 : vector<8x32xf32>
    %455 = arith.mulf %450, %454 : vector<8x32xf32>
    %c5_i32_143 = arith.constant 5 : i32
    %c8_i32_144 = arith.constant 8 : i32
    %456 = arith.muli %c5_i32_143, %c8_i32_144 : i32
    %457 = tpu.assume_multiple %456, 8 : i32
    %458 = arith.index_cast %457 : i32 to index
    %c0_145 = arith.constant 0 : index
    %459 = vector.load %arg9[%458, %c0_145] : memref<64x128xf32, #tpu.memory_space<vmem>>, vector<8x128xf32>
    %c0_146 = arith.constant 0 : index
    %c0_147 = arith.constant 0 : index
    %460 = vector.load %arg5[%c0_146, %c0_147] : memref<32x128xf32, #tpu.memory_space<vmem>>, vector<32x128xf32>
    %cst_148 = arith.constant dense<0.000000e+00> : vector<8x128xf32>
    %461 = tpu.matmul %455, %460, %cst_148 {dimension_numbers = #tpu.dot_dimension_numbers<[1], [0], [0], [1], [0, 0, 1, 1], [], []>} : vector<8x32xf32>, vector<32x128xf32>, vector<8x128xf32> -> vector<8x128xf32>
    %462 = arith.addf %459, %461 : vector<8x128xf32>
    %463 = vector.extract_strided_slice %462 {offsets = [0, 0], sizes = [8, 32], strides = [1, 1]} : vector<8x128xf32> to vector<8x32xf32>
    %464 = arith.negf %463 : vector<8x32xf32>
    %465 = math.exp %464 : vector<8x32xf32>
    %cst_149 = arith.constant 1.000000e+00 : f32
    %466 = vector.broadcast %cst_149 : f32 to vector<8x32xf32>
    %467 = arith.addf %466, %465 : vector<8x32xf32>
    %468 = arith.divf %466, %467 : vector<8x32xf32>
    %469 = vector.extract_strided_slice %462 {offsets = [0, 32], sizes = [8, 32], strides = [1, 1]} : vector<8x128xf32> to vector<8x32xf32>
    %470 = arith.negf %469 : vector<8x32xf32>
    %471 = math.exp %470 : vector<8x32xf32>
    %cst_150 = arith.constant 1.000000e+00 : f32
    %472 = vector.broadcast %cst_150 : f32 to vector<8x32xf32>
    %473 = arith.addf %472, %471 : vector<8x32xf32>
    %474 = arith.divf %472, %473 : vector<8x32xf32>
    %475 = vector.extract_strided_slice %462 {offsets = [0, 64], sizes = [8, 32], strides = [1, 1]} : vector<8x128xf32> to vector<8x32xf32>
    %476 = math.tanh %475 : vector<8x32xf32>
    %477 = vector.extract_strided_slice %462 {offsets = [0, 96], sizes = [8, 32], strides = [1, 1]} : vector<8x128xf32> to vector<8x32xf32>
    %478 = arith.negf %477 : vector<8x32xf32>
    %479 = math.exp %478 : vector<8x32xf32>
    %cst_151 = arith.constant 1.000000e+00 : f32
    %480 = vector.broadcast %cst_151 : f32 to vector<8x32xf32>
    %481 = arith.addf %480, %479 : vector<8x32xf32>
    %482 = arith.divf %480, %481 : vector<8x32xf32>
    %483 = arith.mulf %474, %453 : vector<8x32xf32>
    %484 = arith.mulf %468, %476 : vector<8x32xf32>
    %485 = arith.addf %483, %484 : vector<8x32xf32>
    %486 = math.tanh %485 : vector<8x32xf32>
    %487 = arith.mulf %482, %486 : vector<8x32xf32>
    %c6_i32_152 = arith.constant 6 : i32
    %c8_i32_153 = arith.constant 8 : i32
    %488 = arith.muli %c6_i32_152, %c8_i32_153 : i32
    %489 = tpu.assume_multiple %488, 8 : i32
    %490 = arith.index_cast %489 : i32 to index
    %c0_154 = arith.constant 0 : index
    %491 = vector.load %arg9[%490, %c0_154] : memref<64x128xf32, #tpu.memory_space<vmem>>, vector<8x128xf32>
    %c0_155 = arith.constant 0 : index
    %c0_156 = arith.constant 0 : index
    %492 = vector.load %arg5[%c0_155, %c0_156] : memref<32x128xf32, #tpu.memory_space<vmem>>, vector<32x128xf32>
    %cst_157 = arith.constant dense<0.000000e+00> : vector<8x128xf32>
    %493 = tpu.matmul %487, %492, %cst_157 {dimension_numbers = #tpu.dot_dimension_numbers<[1], [0], [0], [1], [0, 0, 1, 1], [], []>} : vector<8x32xf32>, vector<32x128xf32>, vector<8x128xf32> -> vector<8x128xf32>
    %494 = arith.addf %491, %493 : vector<8x128xf32>
    %495 = vector.extract_strided_slice %494 {offsets = [0, 0], sizes = [8, 32], strides = [1, 1]} : vector<8x128xf32> to vector<8x32xf32>
    %496 = arith.negf %495 : vector<8x32xf32>
    %497 = math.exp %496 : vector<8x32xf32>
    %cst_158 = arith.constant 1.000000e+00 : f32
    %498 = vector.broadcast %cst_158 : f32 to vector<8x32xf32>
    %499 = arith.addf %498, %497 : vector<8x32xf32>
    %500 = arith.divf %498, %499 : vector<8x32xf32>
    %501 = vector.extract_strided_slice %494 {offsets = [0, 32], sizes = [8, 32], strides = [1, 1]} : vector<8x128xf32> to vector<8x32xf32>
    %502 = arith.negf %501 : vector<8x32xf32>
    %503 = math.exp %502 : vector<8x32xf32>
    %cst_159 = arith.constant 1.000000e+00 : f32
    %504 = vector.broadcast %cst_159 : f32 to vector<8x32xf32>
    %505 = arith.addf %504, %503 : vector<8x32xf32>
    %506 = arith.divf %504, %505 : vector<8x32xf32>
    %507 = vector.extract_strided_slice %494 {offsets = [0, 64], sizes = [8, 32], strides = [1, 1]} : vector<8x128xf32> to vector<8x32xf32>
    %508 = math.tanh %507 : vector<8x32xf32>
    %509 = vector.extract_strided_slice %494 {offsets = [0, 96], sizes = [8, 32], strides = [1, 1]} : vector<8x128xf32> to vector<8x32xf32>
    %510 = arith.negf %509 : vector<8x32xf32>
    %511 = math.exp %510 : vector<8x32xf32>
    %cst_160 = arith.constant 1.000000e+00 : f32
    %512 = vector.broadcast %cst_160 : f32 to vector<8x32xf32>
    %513 = arith.addf %512, %511 : vector<8x32xf32>
    %514 = arith.divf %512, %513 : vector<8x32xf32>
    %515 = arith.mulf %506, %485 : vector<8x32xf32>
    %516 = arith.mulf %500, %508 : vector<8x32xf32>
    %517 = arith.addf %515, %516 : vector<8x32xf32>
    %518 = math.tanh %517 : vector<8x32xf32>
    %519 = arith.mulf %514, %518 : vector<8x32xf32>
    %c7_i32_161 = arith.constant 7 : i32
    %c8_i32_162 = arith.constant 8 : i32
    %520 = arith.muli %c7_i32_161, %c8_i32_162 : i32
    %521 = tpu.assume_multiple %520, 8 : i32
    %522 = arith.index_cast %521 : i32 to index
    %c0_163 = arith.constant 0 : index
    %523 = vector.load %arg9[%522, %c0_163] : memref<64x128xf32, #tpu.memory_space<vmem>>, vector<8x128xf32>
    %c0_164 = arith.constant 0 : index
    %c0_165 = arith.constant 0 : index
    %524 = vector.load %arg5[%c0_164, %c0_165] : memref<32x128xf32, #tpu.memory_space<vmem>>, vector<32x128xf32>
    %cst_166 = arith.constant dense<0.000000e+00> : vector<8x128xf32>
    %525 = tpu.matmul %519, %524, %cst_166 {dimension_numbers = #tpu.dot_dimension_numbers<[1], [0], [0], [1], [0, 0, 1, 1], [], []>} : vector<8x32xf32>, vector<32x128xf32>, vector<8x128xf32> -> vector<8x128xf32>
    %526 = arith.addf %523, %525 : vector<8x128xf32>
    %527 = vector.extract_strided_slice %526 {offsets = [0, 0], sizes = [8, 32], strides = [1, 1]} : vector<8x128xf32> to vector<8x32xf32>
    %528 = arith.negf %527 : vector<8x32xf32>
    %529 = math.exp %528 : vector<8x32xf32>
    %cst_167 = arith.constant 1.000000e+00 : f32
    %530 = vector.broadcast %cst_167 : f32 to vector<8x32xf32>
    %531 = arith.addf %530, %529 : vector<8x32xf32>
    %532 = arith.divf %530, %531 : vector<8x32xf32>
    %533 = vector.extract_strided_slice %526 {offsets = [0, 32], sizes = [8, 32], strides = [1, 1]} : vector<8x128xf32> to vector<8x32xf32>
    %534 = arith.negf %533 : vector<8x32xf32>
    %535 = math.exp %534 : vector<8x32xf32>
    %cst_168 = arith.constant 1.000000e+00 : f32
    %536 = vector.broadcast %cst_168 : f32 to vector<8x32xf32>
    %537 = arith.addf %536, %535 : vector<8x32xf32>
    %538 = arith.divf %536, %537 : vector<8x32xf32>
    %539 = vector.extract_strided_slice %526 {offsets = [0, 64], sizes = [8, 32], strides = [1, 1]} : vector<8x128xf32> to vector<8x32xf32>
    %540 = math.tanh %539 : vector<8x32xf32>
    %541 = vector.extract_strided_slice %526 {offsets = [0, 96], sizes = [8, 32], strides = [1, 1]} : vector<8x128xf32> to vector<8x32xf32>
    %542 = arith.negf %541 : vector<8x32xf32>
    %543 = math.exp %542 : vector<8x32xf32>
    %cst_169 = arith.constant 1.000000e+00 : f32
    %544 = vector.broadcast %cst_169 : f32 to vector<8x32xf32>
    %545 = arith.addf %544, %543 : vector<8x32xf32>
    %546 = arith.divf %544, %545 : vector<8x32xf32>
    %547 = arith.mulf %538, %517 : vector<8x32xf32>
    %548 = arith.mulf %532, %540 : vector<8x32xf32>
    %549 = arith.addf %547, %548 : vector<8x32xf32>
    %550 = math.tanh %549 : vector<8x32xf32>
    %551 = arith.mulf %546, %550 : vector<8x32xf32>
    %c8_i32_170 = arith.constant 8 : i32
    %c1 = arith.constant 1 : index
    %c0_171 = arith.constant 0 : index
    %c0_172 = arith.constant 0 : index
    %552 = vector.load %arg7[%c1, %c0_171, %c0_172] : memref<2x8x32xf32, #tpu.memory_space<vmem>>, vector<1x8x32xf32>
    %553 = vector.shape_cast %552 : vector<1x8x32xf32> to vector<8x32xf32>
    %554 = vector.shape_cast %551 : vector<8x32xf32> to vector<1x8x32xf32>
    tpu.vector_store %arg7[%c1, %c0_171, %c0_172], %554 {strides = array<i32>} : memref<2x8x32xf32, #tpu.memory_space<vmem>>, vector<1x8x32xf32>,
    %c1_173 = arith.constant 1 : index
    %c0_174 = arith.constant 0 : index
    %c0_175 = arith.constant 0 : index
    %555 = vector.load %arg8[%c1_173, %c0_174, %c0_175] : memref<2x8x32xf32, #tpu.memory_space<vmem>>, vector<1x8x32xf32>
    %556 = vector.shape_cast %555 : vector<1x8x32xf32> to vector<8x32xf32>
    %557 = vector.shape_cast %549 : vector<8x32xf32> to vector<1x8x32xf32>
    tpu.vector_store %arg8[%c1_173, %c0_174, %c0_175], %557 {strides = array<i32>} : memref<2x8x32xf32, #tpu.memory_space<vmem>>, vector<1x8x32xf32>,
    return
  }
}

</mosaic_0001>

<llo_original>
// kernel: tpu_custom_call.1
$region0: #{tpu_custom_call.1}
  #allocation0 [shape = 'u32[]', space=smem, size = 0x4, offset = 0x4, fixed_abs, tag = 'smem constant byte address 0x4 - core index']
  #allocation1 [shape = 'u32[144,128]{1,0:T(1,128)}', space=vmem, size = 0x12000, scoped, tag = 'internal scratch']
  #allocation2 [shape = 'f32[64,128]{1,0:T(8,128)}', space=vmem, size = 0x8000, scoped, tag = 'scratch operand']
  #allocation3 [shape = 'f32[64,32]{1,0:T(8,128)}', space=vmem, size = 0x8000, scoped, tag = 'scratch operand']
  %s0 = inlined_call_operand.vmem [shape: f32[64,32], index: 0, kind: input, shape index: {}]
  %s1 = inlined_call_operand.vmem [shape: f32[32,128], index: 1, kind: input, shape index: {}]
  %s2 = inlined_call_operand.vmem [shape: f32[32,128], index: 2, kind: input, shape index: {}]
  %s3 = inlined_call_operand.vmem [shape: f32[1,128], index: 3, kind: input, shape index: {}]
  %s4 = inlined_call_operand.vmem [shape: f32[32,128], index: 4, kind: input, shape index: {}]
  %s5 = inlined_call_operand.hbm [shape: f32[32,128], index: 5, kind: input, shape index: {}]
  %s6 = inlined_call_operand.vmem [shape: f32[1,128], index: 6, kind: input, shape index: {}]
  %s7 = inlined_call_operand.hbm [shape: f32[2,8,32], index: 7, kind: output, shape index: {0}]
  %s8 = inlined_call_operand.hbm [shape: f32[2,8,32], index: 8, kind: output, shape index: {1}]
  %9 = xla_tuple %s7, %s8
  %s10 = sld [smem:[#allocation0]]
  $region50: #{tpu_custom_call.1} parent=0
    _
  %s12 = ssub.s32 1, %s10
  %s13 = scalar_select 0, %s12, %s10
  $region1: #{tpu_custom_call.1} parent=0
    #allocation4 [shape = 'u8[16384]{0}', space=vmem, size = 0x4000, scoped, tag = 'input window, operand 5, single buffered']
    #allocation5 [shape = 's32[1]{0}', space=sflag, size = 0x4, scoped, tag = 'scoped memory for tpu_custom_call.1']
    #allocation6 [shape = 's32[1]{0}', space=sflag, size = 0x4, scoped, tag = 'scoped memory for tpu_custom_call.1']
    #allocation7 [shape = 'u8[8192]{0}', space=vmem, size = 0x2000, scoped, tag = 'output window, operand 0, single buffered']
    #allocation8 [shape = 'u8[8192]{0}', space=vmem, size = 0x2000, scoped, tag = 'output window, operand 1, single buffered']
    #allocation9 [shape = 's32[1]{0}', space=sflag, size = 0x4, scoped, tag = 'scoped memory for tpu_custom_call.1']
    %14 = vsyncpa [#allocation5], 0
    %15 = vsyncpa [#allocation6], 0
    %16 = vsyncpa [#allocation9], 0
    // Predicated region
    $region2: #{tpu_custom_call.1} parent=1 // pred_check
      _
    $region3: #{tpu_custom_call.1} parent=1 // pred_check_branch
      %18 = sbr.rel (0) target = $region5
    $region4: #{tpu_custom_call.1} parent=1 // pred_region
      _
    $region5: #{tpu_custom_call.1} parent=1 // pred_fallthru
      _
    // Predicated region
    $region6: #{tpu_custom_call.1} parent=1 // pred_check
      _
    $region7: #{tpu_custom_call.1} parent=1 // pred_check_branch
      %20 = sbr.rel (0) target = $region9
    $region8: #{tpu_custom_call.1} parent=1 // pred_region
      _
    $region9: #{tpu_custom_call.1} parent=1 // pred_fallthru
      _
    // Predicated region
    $region10: #{tpu_custom_call.1} parent=1 // pred_check
      _
    $region11: #{tpu_custom_call.1} parent=1 // pred_check_branch
      %22 = sbr.rel (0) target = $region13
    $region12: #{tpu_custom_call.1} parent=1 // pred_region
      _
    $region13: #{tpu_custom_call.1} parent=1 // pred_fallthru
      _
    // Predicated region
    $region14: #{tpu_custom_call.1} parent=1 // pred_check
      _
    $region15: #{tpu_custom_call.1} parent=1 // pred_check_branch
      %24 = sbr.rel (0) target = $region17
    $region16: #{tpu_custom_call.1} parent=1 // pred_region
      _
    $region17: #{tpu_custom_call.1} parent=1 // pred_fallthru
      _
    // Predicated region
    $region18: #{tpu_custom_call.1} parent=1 // pred_check
      _
    $region19: #{tpu_custom_call.1} parent=1 // pred_check_branch
      %26 = sbr.rel (0) target = $region21
    $region20: #{tpu_custom_call.1} parent=1 // pred_region
      _
    $region21: #{tpu_custom_call.1} parent=1 // pred_fallthru
      _
    // Predicated region
    $region22: #{tpu_custom_call.1} parent=1 // pred_check
      _
    $region23: #{tpu_custom_call.1} parent=1 // pred_check_branch
      %28 = sbr.rel (0) target = $region25
    $region24: #{tpu_custom_call.1} parent=1 // pred_region
      %s30 = ssub.s32 512, 512
      %31 = vsyncadd [#allocation5], %s30
      %s32 = sshll.u32 [#allocation4], 4
      %s33 = int_to_ptr.vmem [resolvable:$true] %s32
      %38 = dma.hbm_to_vmem [thread:$0]  %s5, 512, %s33, [#allocation5], 128, 128, 8
    $region25: #{tpu_custom_call.1} parent=1 // pred_fallthru
      _
    // Predicated region
    $region26: #{tpu_custom_call.1} parent=1 // pred_check
      _
    $region27: #{tpu_custom_call.1} parent=1 // pred_check_branch
      %40 = sbr.rel (0) target = $region29
    $region28: #{tpu_custom_call.1} parent=1 // pred_region
      _
    $region29: #{tpu_custom_call.1} parent=1 // pred_fallthru
      _
    // Predicated region
    $region30: #{tpu_custom_call.1} parent=1 // pred_check
      _
    $region31: #{tpu_custom_call.1} parent=1 // pred_check_branch
      %42 = sbr.rel (0) target = $region33
    $region32: #{tpu_custom_call.1} parent=1 // pred_region
      %43 = dma.done [#allocation5], 512
    $region33: #{tpu_custom_call.1} parent=1 // pred_fallthru
      _
    %v44 = vld [vmem:[%s0] sm:$0xff]
    %v45 = vld [vmem:[%s0 + $0x8] sm:$0xff]
    %v46 = vld [vmem:[%s0 + $0x10] sm:$0xff]
    %v47 = vld [vmem:[%s0 + $0x18] sm:$0xff]
    %v48 = vld [vmem:[%s0 + $0x20] sm:$0xff]
    %v49 = vld [vmem:[%s0 + $0x28] sm:$0xff]
    %v50 = vld [vmem:[%s0 + $0x30] sm:$0xff]
    %v51 = vld [vmem:[%s0 + $0x38] sm:$0xff]
    %v52 = vld [vmem:[%s1] sm:$0xff]
    %v53 = vld [vmem:[%s1 + $0x8] sm:$0xff]
    %v54 = vld [vmem:[%s1 + $0x10] sm:$0xff]
    %v55 = vld [vmem:[%s1 + $0x18] sm:$0xff]
    %v56 = vld [vmem:[%s3] sm:$0x1]
    %v58 = vlaneseq
    %v59 = vshrl.u32 %v58, 7
    %v60 = vsub.s32 0, %v59
    %v61 = vrot.slane %v56, %v60
    %vm63 = vcmask 261120
    %v65 = vsel %vm63, %v44, 0
    %v68 = vsel %vm63, %v45, 0
    %v71 = vsel %vm63, %v46, 0
    %v74 = vsel %vm63, %v47, 0
    %v77 = vsel %vm63, %v48, 0
    %v80 = vsel %vm63, %v49, 0
    %v83 = vsel %vm63, %v50, 0
    %v86 = vsel %vm63, %v51, 0
    %88 = vmatprep.subr.mxu0 0.0
    %89 = vmatpush1.msra.mxu0 %v52
    %90 = vmatprep.subr.mxu0 0.0
    %91 = vmatpush1.msra.mxu0 %v53
    %92 = vmatprep.subr.mxu0 0.0
    %93 = vmatpush1.msra.mxu0 %v54
    %94 = vmatprep.subr.mxu0 0.0
    %95 = vmatpush1.msra.mxu0 %v55
    %96 = vmatprep.subr.mxu0 0.0
    %97 = vmatpush1.msra.mxu0 0.0
    %98 = vmatprep.subr.mxu0 0.0
    %99 = vmatpush1.msra.mxu0 0.0
    %100 = vmatprep.subr.mxu0 0.0
    %101 = vmatpush1.msra.mxu0 0.0
    %102 = vmatprep.subr.mxu0 0.0
    %103 = vmatpush1.msra.mxu0 0.0
    %104 = vmatprep.subr.mxu0 0.0
    %105 = vmatpush1.msra.mxu0 0.0
    %106 = vmatprep.subr.mxu0 0.0
    %107 = vmatpush1.msra.mxu0 0.0
    %108 = vmatprep.subr.mxu0 0.0
    %109 = vmatpush1.msra.mxu0 0.0
    %110 = vmatprep.subr.mxu0 0.0
    %111 = vmatpush1.msra.mxu0 0.0
    %112 = vmatprep.subr.mxu0 0.0
    %113 = vmatpush1.msra.mxu0 0.0
    %114 = vmatprep.subr.mxu0 0.0
    %115 = vmatpush1.msra.mxu0 0.0
    %116 = vmatprep.subr.mxu0 0.0
    %117 = vmatpush1.msra.mxu0 0.0
    %118 = vmatprep.subr.mxu0 0.0
    %119 = vmatpush1.msra.mxu0 0.0
    %120 = vmatprep.subr.mxu0 0.0
    %121 = vmatpush1.msra.mxu0 0.0
    %122 = vmatprep.subr.mxu0 0.0
    %123 = vmatpush1.msra.mxu0 0.0
    %124 = vmatprep.subr.mxu0 0.0
    %125 = vmatpush1.msra.mxu0 0.0
    %126 = vmatprep.subr.mxu0 0.0
    %127 = vmatpush1.msra.mxu0 0.0
    %128 = vmatprep.subr.mxu0 0.0
    %129 = vmatpush1.msra.mxu0 0.0
    %130 = vmatprep.subr.mxu0 0.0
    %131 = vmatpush1.msra.mxu0 0.0
    %132 = vmatprep.subr.mxu0 0.0
    %133 = vmatpush1.msra.mxu0 0.0
    %134 = vmatprep.subr.mxu0 0.0
    %135 = vmatpush1.msra.mxu0 0.0
    %136 = vmatprep.subr.mxu0 0.0
    %137 = vmatpush1.msra.mxu0 0.0
    %138 = vmatprep.subr.mxu0 0.0
    %139 = vmatpush1.msra.mxu0 0.0
    %140 = vmatprep.subr.mxu0 0.0
    %141 = vmatpush1.msra.mxu0 0.0
    %142 = vmatprep.subr.mxu0 0.0
    %143 = vmatpush1.msra.mxu0 0.0
    %144 = vmatprep.subr.mxu0 0.0
    %145 = vmatpush1.msra.mxu0 0.0
    %146 = vmatprep.subr.mxu0 0.0
    %147 = vmatpush1.msra.mxu0 0.0
    %148 = vmatprep.subr.mxu0 0.0
    %149 = vmatpush1.msra.mxu0 0.0
    %150 = vmatprep.subr.mxu0 0.0
    %151 = vmatpush1.msra.mxu0 0.0
    %152 = vmatprep.mubr.f32.mxu0 0.0
    %153 = vmatmul.mubr.f32.gmra.mrb[0].mxu0 %v65
    %v154 = vpop.f32.mrb[0].mxu0
    %v155 = vadd.f32 %v61, %v154
    %v156 = vpop.f32.mrb[0].mxu0
    %157 = vmatprep.mubr.f32.mxu0 0.0
    %158 = vmatmul.mubr.f32.gmra.mrb[0].mxu0 %v68
    %v159 = vpop.f32.mrb[0].mxu0
    %v160 = vadd.f32 %v61, %v159
    %v161 = vpop.f32.mrb[0].mxu0
    %162 = vmatprep.mubr.f32.mxu0 0.0
    %163 = vmatmul.mubr.f32.gmra.mrb[0].mxu0 %v71
    %v164 = vpop.f32.mrb[0].mxu0
    %v165 = vadd.f32 %v61, %v164
    %v166 = vpop.f32.mrb[0].mxu0
    %167 = vmatprep.mubr.f32.mxu0 0.0
    %168 = vmatmul.mubr.f32.gmra.mrb[0].mxu0 %v74
    %v169 = vpop.f32.mrb[0].mxu0
    %v170 = vadd.f32 %v61, %v169
    %v171 = vpop.f32.mrb[0].mxu0
    %172 = vmatprep.mubr.f32.mxu0 0.0
    %173 = vmatmul.mubr.f32.gmra.mrb[0].mxu0 %v77
    %v174 = vpop.f32.mrb[0].mxu0
    %v175 = vadd.f32 %v61, %v174
    %v176 = vpop.f32.mrb[0].mxu0
    %177 = vmatprep.mubr.f32.mxu0 0.0
    %178 = vmatmul.mubr.f32.gmra.mrb[0].mxu0 %v80
    %v179 = vpop.f32.mrb[0].mxu0
    %v180 = vadd.f32 %v61, %v179
    %v181 = vpop.f32.mrb[0].mxu0
    %182 = vmatprep.mubr.f32.mxu0 0.0
    %183 = vmatmul.mubr.f32.gmra.mrb[0].mxu0 %v83
    %v184 = vpop.f32.mrb[0].mxu0
    %v185 = vadd.f32 %v61, %v184
    %v186 = vpop.f32.mrb[0].mxu0
    %187 = vmatprep.mubr.f32.mxu0 0.0
    %188 = vmatmul.mubr.f32.gmra.mrb[0].mxu0 %v86
    %v189 = vpop.f32.mrb[0].mxu0
    %v190 = vadd.f32 %v61, %v189
    %v191 = vpop.f32.mrb[0].mxu0
    %192 = vdwg.mxu0
    %193 = vst [vmem:[#allocation2] sm:$0xff] %v155
    %194 = vst [vmem:[#allocation2 + $0x8] sm:$0xff] %v160
    %195 = vst [vmem:[#allocation2 + $0x10] sm:$0xff] %v165
    %196 = vst [vmem:[#allocation2 + $0x18] sm:$0xff] %v170
    %197 = vst [vmem:[#allocation2 + $0x20] sm:$0xff] %v175
    %198 = vst [vmem:[#allocation2 + $0x28] sm:$0xff] %v180
    %199 = vst [vmem:[#allocation2 + $0x30] sm:$0xff] %v185
    %200 = vst [vmem:[#allocation2 + $0x38] sm:$0xff] %v190
    %v201 = vld [vmem:[#allocation2] sm:$0xff]
    %v202 = vld [vmem:[%s2] sm:$0xff]
    %v203 = vld [vmem:[%s2 + $0x8] sm:$0xff]
    %v204 = vld [vmem:[%s2 + $0x10] sm:$0xff]
    %v205 = vld [vmem:[%s2 + $0x18] sm:$0xff]
    %v207 = vsel %vm63, 0.0, 0
    %209 = vmatprep.subr.mxu0 0.0
    %210 = vmatpush1.msra.mxu0 %v202
    %211 = vmatprep.subr.mxu0 0.0
    %212 = vmatpush1.msra.mxu0 %v203
    %213 = vmatprep.subr.mxu0 0.0
    %214 = vmatpush1.msra.mxu0 %v204
    %215 = vmatprep.subr.mxu0 0.0
    %216 = vmatpush1.msra.mxu0 %v205
    %217 = vmatprep.subr.mxu0 0.0
    %218 = vmatpush1.msra.mxu0 0.0
    %219 = vmatprep.subr.mxu0 0.0
    %220 = vmatpush1.msra.mxu0 0.0
    %221 = vmatprep.subr.mxu0 0.0
    %222 = vmatpush1.msra.mxu0 0.0
    %223 = vmatprep.subr.mxu0 0.0
    %224 = vmatpush1.msra.mxu0 0.0
    %225 = vmatprep.subr.mxu0 0.0
    %226 = vmatpush1.msra.mxu0 0.0
    %227 = vmatprep.subr.mxu0 0.0
    %228 = vmatpush1.msra.mxu0 0.0
    %229 = vmatprep.subr.mxu0 0.0
    %230 = vmatpush1.msra.mxu0 0.0
    %231 = vmatprep.subr.mxu0 0.0
    %232 = vmatpush1.msra.mxu0 0.0
    %233 = vmatprep.subr.mxu0 0.0
    %234 = vmatpush1.msra.mxu0 0.0
    %235 = vmatprep.subr.mxu0 0.0
    %236 = vmatpush1.msra.mxu0 0.0
    %237 = vmatprep.subr.mxu0 0.0
    %238 = vmatpush1.msra.mxu0 0.0
    %239 = vmatprep.subr.mxu0 0.0
    %240 = vmatpush1.msra.mxu0 0.0
    %241 = vmatprep.subr.mxu0 0.0
    %242 = vmatpush1.msra.mxu0 0.0
    %243 = vmatprep.subr.mxu0 0.0
    %244 = vmatpush1.msra.mxu0 0.0
    %245 = vmatprep.subr.mxu0 0.0
    %246 = vmatpush1.msra.mxu0 0.0
    %247 = vmatprep.subr.mxu0 0.0
    %248 = vmatpush1.msra.mxu0 0.0
    %249 = vmatprep.subr.mxu0 0.0
    %250 = vmatpush1.msra.mxu0 0.0
    %251 = vmatprep.subr.mxu0 0.0
    %252 = vmatpush1.msra.mxu0 0.0
    %253 = vmatprep.subr.mxu0 0.0
    %254 = vmatpush1.msra.mxu0 0.0
    %255 = vmatprep.subr.mxu0 0.0
    %256 = vmatpush1.msra.mxu0 0.0
    %257 = vmatprep.subr.mxu0 0.0
    %258 = vmatpush1.msra.mxu0 0.0
    %259 = vmatprep.subr.mxu0 0.0
    %260 = vmatpush1.msra.mxu0 0.0
    %261 = vmatprep.subr.mxu0 0.0
    %262 = vmatpush1.msra.mxu0 0.0
    %263 = vmatprep.subr.mxu0 0.0
    %264 = vmatpush1.msra.mxu0 0.0
    %265 = vmatprep.subr.mxu0 0.0
    %266 = vmatpush1.msra.mxu0 0.0
    %267 = vmatprep.subr.mxu0 0.0
    %268 = vmatpush1.msra.mxu0 0.0
    %269 = vmatprep.subr.mxu0 0.0
    %270 = vmatpush1.msra.mxu0 0.0
    %271 = vmatprep.subr.mxu0 0.0
    %272 = vmatpush1.msra.mxu0 0.0
    %273 = vmatprep.mubr.f32.mxu0 0.0
    %274 = vmatmul.mubr.f32.gmra.mrb[0].mxu0 %v207
    %v275 = vpop.f32.mrb[0].mxu0
    %v276 = vadd.f32 0.0, %v275
    %v277 = vpop.f32.mrb[0].mxu0
    %278 = vdwg.mxu0
    %v279 = vadd.f32 %v201, %v276
    %v280 = vxor.u32 %v279, 2147483648
    %v281 = vmul.f32 %v280, 1.442695
    %v282 = vpow.pop %v281
    %v283 = vadd.f32 %v282, 1.0
    %v284 = vrcp.pop %v283
    %v285 = vmul.f32 1.0, %v284
    %v286 = vtanh.pop %v279
    %v287 = vmul.f32 %v285, 0.0
    %289 = vrot.lane.b32.xlu0 %v286, 64
    %v290 = vpop.permute.xlu0 %289
    %v292 = vmul.f32 %v285, %v290
    %294 = vrot.lane.b32.xlu0 %v292, 32
    %v295 = vpop.permute.xlu0 %294
    %v297 = vadd.f32 %v287, %v295
    %v298 = vtanh.pop %v297
    %300 = vrot.lane.b32.xlu0 %v298, 64
    %v301 = vpop.permute.xlu0 %300
    %v303 = vmul.f32 %v285, %v301
    %305 = vrot.lane.b32.xlu0 %v303, 32
    %v306 = vpop.permute.xlu0 %305
    %308 = vst.msk [vmem:[#allocation3] sm:$0xff] %vm63, %v306
    %s309 = scalar_lea.vmem [#allocation2], 8
    %v310 = vld [vmem:[%s309] sm:$0xff]
    %v311 = vld [vmem:[%s2] sm:$0xff]
    %v312 = vld [vmem:[%s2 + $0x8] sm:$0xff]
    %v313 = vld [vmem:[%s2 + $0x10] sm:$0xff]
    %v314 = vld [vmem:[%s2 + $0x18] sm:$0xff]
    %v315 = vsel %vm63, %v306, 0
    %317 = vmatprep.subr.mxu0 0.0
    %318 = vmatpush1.msra.mxu0 %v311
    %319 = vmatprep.subr.mxu0 0.0
    %320 = vmatpush1.msra.mxu0 %v312
    %321 = vmatprep.subr.mxu0 0.0
    %322 = vmatpush1.msra.mxu0 %v313
    %323 = vmatprep.subr.mxu0 0.0
    %324 = vmatpush1.msra.mxu0 %v314
    %325 = vmatprep.subr.mxu0 0.0
    %326 = vmatpush1.msra.mxu0 0.0
    %327 = vmatprep.subr.mxu0 0.0
    %328 = vmatpush1.msra.mxu0 0.0
    %329 = vmatprep.subr.mxu0 0.0
    %330 = vmatpush1.msra.mxu0 0.0
    %331 = vmatprep.subr.mxu0 0.0
    %332 = vmatpush1.msra.mxu0 0.0
    %333 = vmatprep.subr.mxu0 0.0
    %334 = vmatpush1.msra.mxu0 0.0
    %335 = vmatprep.subr.mxu0 0.0
    %336 = vmatpush1.msra.mxu0 0.0
    %337 = vmatprep.subr.mxu0 0.0
    %338 = vmatpush1.msra.mxu0 0.0
    %339 = vmatprep.subr.mxu0 0.0
    %340 = vmatpush1.msra.mxu0 0.0
    %341 = vmatprep.subr.mxu0 0.0
    %342 = vmatpush1.msra.mxu0 0.0
    %343 = vmatprep.subr.mxu0 0.0
    %344 = vmatpush1.msra.mxu0 0.0
    %345 = vmatprep.subr.mxu0 0.0
    %346 = vmatpush1.msra.mxu0 0.0
    %347 = vmatprep.subr.mxu0 0.0
    %348 = vmatpush1.msra.mxu0 0.0
    %349 = vmatprep.subr.mxu0 0.0
    %350 = vmatpush1.msra.mxu0 0.0
    %351 = vmatprep.subr.mxu0 0.0
    %352 = vmatpush1.msra.mxu0 0.0
    %353 = vmatprep.subr.mxu0 0.0
    %354 = vmatpush1.msra.mxu0 0.0
    %355 = vmatprep.subr.mxu0 0.0
    %356 = vmatpush1.msra.mxu0 0.0
    %357 = vmatprep.subr.mxu0 0.0
    %358 = vmatpush1.msra.mxu0 0.0
    %359 = vmatprep.subr.mxu0 0.0
    %360 = vmatpush1.msra.mxu0 0.0
    %361 = vmatprep.subr.mxu0 0.0
    %362 = vmatpush1.msra.mxu0 0.0
    %363 = vmatprep.subr.mxu0 0.0
    %364 = vmatpush1.msra.mxu0 0.0
    %365 = vmatprep.subr.mxu0 0.0
    %366 = vmatpush1.msra.mxu0 0.0
    %367 = vmatprep.subr.mxu0 0.0
    %368 = vmatpush1.msra.mxu0 0.0
    %369 = vmatprep.subr.mxu0 0.0
    %370 = vmatpush1.msra.mxu0 0.0
    %371 = vmatprep.subr.mxu0 0.0
    %372 = vmatpush1.msra.mxu0 0.0
    %373 = vmatprep.subr.mxu0 0.0
    %374 = vmatpush1.msra.mxu0 0.0
    %375 = vmatprep.subr.mxu0 0.0
    %376 = vmatpush1.msra.mxu0 0.0
    %377 = vmatprep.subr.mxu0 0.0
    %378 = vmatpush1.msra.mxu0 0.0
    %379 = vmatprep.subr.mxu0 0.0
    %380 = vmatpush1.msra.mxu0 0.0
    %381 = vmatprep.mubr.f32.mxu0 0.0
    %382 = vmatmul.mubr.f32.gmra.mrb[0].mxu0 %v315
    %v383 = vpop.f32.mrb[0].mxu0
    %v384 = vadd.f32 0.0, %v383
    %v385 = vpop.f32.mrb[0].mxu0
    %386 = vdwg.mxu0
    %v387 = vadd.f32 %v310, %v384
    %v388 = vxor.u32 %v387, 2147483648
    %v389 = vmul.f32 %v388, 1.442695
    %v390 = vpow.pop %v389
    %v391 = vadd.f32 %v390, 1.0
    %v392 = vrcp.pop %v391
    %v393 = vmul.f32 1.0, %v392
    %v394 = vtanh.pop %v387
    %v395 = vmul.f32 %v393, %v297
    %397 = vrot.lane.b32.xlu0 %v394, 64
    %v398 = vpop.permute.xlu0 %397
    %v400 = vmul.f32 %v393, %v398
    %402 = vrot.lane.b32.xlu0 %v400, 32
    %v403 = vpop.permute.xlu0 %402
    %v405 = vadd.f32 %v395, %v403
    %v406 = vtanh.pop %v405
    %408 = vrot.lane.b32.xlu0 %v406, 64
    %v409 = vpop.permute.xlu0 %408
    %v411 = vmul.f32 %v393, %v409
    %413 = vrot.lane.b32.xlu0 %v411, 32
    %v414 = vpop.permute.xlu0 %413
    %s416 = scalar_lea.vmem [#allocation3], 8
    %417 = vst.msk [vmem:[%s416] sm:$0xff] %vm63, %v414
    %s418 = scalar_lea.vmem [#allocation2], 16
    %v419 = vld [vmem:[%s418] sm:$0xff]
    %v420 = vld [vmem:[%s2] sm:$0xff]
    %v421 = vld [vmem:[%s2 + $0x8] sm:$0xff]
    %v422 = vld [vmem:[%s2 + $0x10] sm:$0xff]
    %v423 = vld [vmem:[%s2 + $0x18] sm:$0xff]
    %v424 = vsel %vm63, %v414, 0
    %426 = vmatprep.subr.mxu0 0.0
    %427 = vmatpush1.msra.mxu0 %v420
    %428 = vmatprep.subr.mxu0 0.0
    %429 = vmatpush1.msra.mxu0 %v421
    %430 = vmatprep.subr.mxu0 0.0
    %431 = vmatpush1.msra.mxu0 %v422
    %432 = vmatprep.subr.mxu0 0.0
    %433 = vmatpush1.msra.mxu0 %v423
    %434 = vmatprep.subr.mxu0 0.0
    %435 = vmatpush1.msra.mxu0 0.0
    %436 = vmatprep.subr.mxu0 0.0
    %437 = vmatpush1.msra.mxu0 0.0
    %438 = vmatprep.subr.mxu0 0.0
    %439 = vmatpush1.msra.mxu0 0.0
    %440 = vmatprep.subr.mxu0 0.0
    %441 = vmatpush1.msra.mxu0 0.0
    %442 = vmatprep.subr.mxu0 0.0
    %443 = vmatpush1.msra.mxu0 0.0
    %444 = vmatprep.subr.mxu0 0.0
    %445 = vmatpush1.msra.mxu0 0.0
    %446 = vmatprep.subr.mxu0 0.0
    %447 = vmatpush1.msra.mxu0 0.0
    %448 = vmatprep.subr.mxu0 0.0
    %449 = vmatpush1.msra.mxu0 0.0
    %450 = vmatprep.subr.mxu0 0.0
    %451 = vmatpush1.msra.mxu0 0.0
    %452 = vmatprep.subr.mxu0 0.0
    %453 = vmatpush1.msra.mxu0 0.0
    %454 = vmatprep.subr.mxu0 0.0
    %455 = vmatpush1.msra.mxu0 0.0
    %456 = vmatprep.subr.mxu0 0.0
    %457 = vmatpush1.msra.mxu0 0.0
    %458 = vmatprep.subr.mxu0 0.0
    %459 = vmatpush1.msra.mxu0 0.0
    %460 = vmatprep.subr.mxu0 0.0
    %461 = vmatpush1.msra.mxu0 0.0
    %462 = vmatprep.subr.mxu0 0.0
    %463 = vmatpush1.msra.mxu0 0.0
    %464 = vmatprep.subr.mxu0 0.0
    %465 = vmatpush1.msra.mxu0 0.0
    %466 = vmatprep.subr.mxu0 0.0
    %467 = vmatpush1.msra.mxu0 0.0
    %468 = vmatprep.subr.mxu0 0.0
    %469 = vmatpush1.msra.mxu0 0.0
    %470 = vmatprep.subr.mxu0 0.0
    %471 = vmatpush1.msra.mxu0 0.0
    %472 = vmatprep.subr.mxu0 0.0
    %473 = vmatpush1.msra.mxu0 0.0
    %474 = vmatprep.subr.mxu0 0.0
    %475 = vmatpush1.msra.mxu0 0.0
    %476 = vmatprep.subr.mxu0 0.0
    %477 = vmatpush1.msra.mxu0 0.0
    %478 = vmatprep.subr.mxu0 0.0
    %479 = vmatpush1.msra.mxu0 0.0
    %480 = vmatprep.subr.mxu0 0.0
    %481 = vmatpush1.msra.mxu0 0.0
    %482 = vmatprep.subr.mxu0 0.0
    %483 = vmatpush1.msra.mxu0 0.0
    %484 = vmatprep.subr.mxu0 0.0
    %485 = vmatpush1.msra.mxu0 0.0
    %486 = vmatprep.subr.mxu0 0.0
    %487 = vmatpush1.msra.mxu0 0.0
    %488 = vmatprep.subr.mxu0 0.0
    %489 = vmatpush1.msra.mxu0 0.0
    %490 = vmatprep.mubr.f32.mxu0 0.0
    %491 = vmatmul.mubr.f32.gmra.mrb[0].mxu0 %v424
    %v492 = vpop.f32.mrb[0].mxu0
    %v493 = vadd.f32 0.0, %v492
    %v494 = vpop.f32.mrb[0].mxu0
    %495 = vdwg.mxu0
    %v496 = vadd.f32 %v419, %v493
    %v497 = vxor.u32 %v496, 2147483648
    %v498 = vmul.f32 %v497, 1.442695
    %v499 = vpow.pop %v498
    %v500 = vadd.f32 %v499, 1.0
    %v501 = vrcp.pop %v500
    %v502 = vmul.f32 1.0, %v501
    %v503 = vtanh.pop %v496
    %v504 = vmul.f32 %v502, %v405
    %506 = vrot.lane.b32.xlu0 %v503, 64
    %v507 = vpop.permute.xlu0 %506
    %v509 = vmul.f32 %v502, %v507
    %511 = vrot.lane.b32.xlu0 %v509, 32
    %v512 = vpop.permute.xlu0 %511
    %v514 = vadd.f32 %v504, %v512
    %v515 = vtanh.pop %v514
    %517 = vrot.lane.b32.xlu0 %v515, 64
    %v518 = vpop.permute.xlu0 %517
    %v520 = vmul.f32 %v502, %v518
    %522 = vrot.lane.b32.xlu0 %v520, 32
    %v523 = vpop.permute.xlu0 %522
    %s525 = scalar_lea.vmem [#allocation3], 16
    %526 = vst.msk [vmem:[%s525] sm:$0xff] %vm63, %v523
    %s527 = scalar_lea.vmem [#allocation2], 24
    %v528 = vld [vmem:[%s527] sm:$0xff]
    %v529 = vld [vmem:[%s2] sm:$0xff]
    %v530 = vld [vmem:[%s2 + $0x8] sm:$0xff]
    %v531 = vld [vmem:[%s2 + $0x10] sm:$0xff]
    %v532 = vld [vmem:[%s2 + $0x18] sm:$0xff]
    %v533 = vsel %vm63, %v523, 0
    %535 = vmatprep.subr.mxu0 0.0
    %536 = vmatpush1.msra.mxu0 %v529
    %537 = vmatprep.subr.mxu0 0.0
    %538 = vmatpush1.msra.mxu0 %v530
    %539 = vmatprep.subr.mxu0 0.0
    %540 = vmatpush1.msra.mxu0 %v531
    %541 = vmatprep.subr.mxu0 0.0
    %542 = vmatpush1.msra.mxu0 %v532
    %543 = vmatprep.subr.mxu0 0.0
    %544 = vmatpush1.msra.mxu0 0.0
    %545 = vmatprep.subr.mxu0 0.0
    %546 = vmatpush1.msra.mxu0 0.0
    %547 = vmatprep.subr.mxu0 0.0
    %548 = vmatpush1.msra.mxu0 0.0
    %549 = vmatprep.subr.mxu0 0.0
    %550 = vmatpush1.msra.mxu0 0.0
    %551 = vmatprep.subr.mxu0 0.0
    %552 = vmatpush1.msra.mxu0 0.0
    %553 = vmatprep.subr.mxu0 0.0
    %554 = vmatpush1.msra.mxu0 0.0
    %555 = vmatprep.subr.mxu0 0.0
    %556 = vmatpush1.msra.mxu0 0.0
    %557 = vmatprep.subr.mxu0 0.0
    %558 = vmatpush1.msra.mxu0 0.0
    %559 = vmatprep.subr.mxu0 0.0
    %560 = vmatpush1.msra.mxu0 0.0
    %561 = vmatprep.subr.mxu0 0.0
    %562 = vmatpush1.msra.mxu0 0.0
    %563 = vmatprep.subr.mxu0 0.0
    %564 = vmatpush1.msra.mxu0 0.0
    %565 = vmatprep.subr.mxu0 0.0
    %566 = vmatpush1.msra.mxu0 0.0
    %567 = vmatprep.subr.mxu0 0.0
    %568 = vmatpush1.msra.mxu0 0.0
    %569 = vmatprep.subr.mxu0 0.0
    %570 = vmatpush1.msra.mxu0 0.0
    %571 = vmatprep.subr.mxu0 0.0
    %572 = vmatpush1.msra.mxu0 0.0
    %573 = vmatprep.subr.mxu0 0.0
    %574 = vmatpush1.msra.mxu0 0.0
    %575 = vmatprep.subr.mxu0 0.0
    %576 = vmatpush1.msra.mxu0 0.0
    %577 = vmatprep.subr.mxu0 0.0
    %578 = vmatpush1.msra.mxu0 0.0
    %579 = vmatprep.subr.mxu0 0.0
    %580 = vmatpush1.msra.mxu0 0.0
    %581 = vmatprep.subr.mxu0 0.0
    %582 = vmatpush1.msra.mxu0 0.0
    %583 = vmatprep.subr.mxu0 0.0
    %584 = vmatpush1.msra.mxu0 0.0
    %585 = vmatprep.subr.mxu0 0.0
    %586 = vmatpush1.msra.mxu0 0.0
    %587 = vmatprep.subr.mxu0 0.0
    %588 = vmatpush1.msra.mxu0 0.0
    %589 = vmatprep.subr.mxu0 0.0
    %590 = vmatpush1.msra.mxu0 0.0
    %591 = vmatprep.subr.mxu0 0.0
    %592 = vmatpush1.msra.mxu0 0.0
    %593 = vmatprep.subr.mxu0 0.0
    %594 = vmatpush1.msra.mxu0 0.0
    %595 = vmatprep.subr.mxu0 0.0
    %596 = vmatpush1.msra.mxu0 0.0
    %597 = vmatprep.subr.mxu0 0.0
    %598 = vmatpush1.msra.mxu0 0.0
    %599 = vmatprep.mubr.f32.mxu0 0.0
    %600 = vmatmul.mubr.f32.gmra.mrb[0].mxu0 %v533
    %v601 = vpop.f32.mrb[0].mxu0
    %v602 = vadd.f32 0.0, %v601
    %v603 = vpop.f32.mrb[0].mxu0
    %604 = vdwg.mxu0
    %v605 = vadd.f32 %v528, %v602
    %v606 = vxor.u32 %v605, 2147483648
    %v607 = vmul.f32 %v606, 1.442695
    %v608 = vpow.pop %v607
    %v609 = vadd.f32 %v608, 1.0
    %v610 = vrcp.pop %v609
    %v611 = vmul.f32 1.0, %v610
    %v612 = vtanh.pop %v605
    %v613 = vmul.f32 %v611, %v514
    %615 = vrot.lane.b32.xlu0 %v612, 64
    %v616 = vpop.permute.xlu0 %615
    %v618 = vmul.f32 %v611, %v616
    %620 = vrot.lane.b32.xlu0 %v618, 32
    %v621 = vpop.permute.xlu0 %620
    %v623 = vadd.f32 %v613, %v621
    %v624 = vtanh.pop %v623
    %626 = vrot.lane.b32.xlu0 %v624, 64
    %v627 = vpop.permute.xlu0 %626
    %v629 = vmul.f32 %v611, %v627
    %631 = vrot.lane.b32.xlu0 %v629, 32
    %v632 = vpop.permute.xlu0 %631
    %s634 = scalar_lea.vmem [#allocation3], 24
    %635 = vst.msk [vmem:[%s634] sm:$0xff] %vm63, %v632
    %s636 = scalar_lea.vmem [#allocation2], 32
    %v637 = vld [vmem:[%s636] sm:$0xff]
    %v638 = vld [vmem:[%s2] sm:$0xff]
    %v639 = vld [vmem:[%s2 + $0x8] sm:$0xff]
    %v640 = vld [vmem:[%s2 + $0x10] sm:$0xff]
    %v641 = vld [vmem:[%s2 + $0x18] sm:$0xff]
    %v642 = vsel %vm63, %v632, 0
    %644 = vmatprep.subr.mxu0 0.0
    %645 = vmatpush1.msra.mxu0 %v638
    %646 = vmatprep.subr.mxu0 0.0
    %647 = vmatpush1.msra.mxu0 %v639
    %648 = vmatprep.subr.mxu0 0.0
    %649 = vmatpush1.msra.mxu0 %v640
    %650 = vmatprep.subr.mxu0 0.0
    %651 = vmatpush1.msra.mxu0 %v641
    %652 = vmatprep.subr.mxu0 0.0
    %653 = vmatpush1.msra.mxu0 0.0
    %654 = vmatprep.subr.mxu0 0.0
    %655 = vmatpush1.msra.mxu0 0.0
    %656 = vmatprep.subr.mxu0 0.0
    %657 = vmatpush1.msra.mxu0 0.0
    %658 = vmatprep.subr.mxu0 0.0
    %659 = vmatpush1.msra.mxu0 0.0
    %660 = vmatprep.subr.mxu0 0.0
    %661 = vmatpush1.msra.mxu0 0.0
    %662 = vmatprep.subr.mxu0 0.0
    %663 = vmatpush1.msra.mxu0 0.0
    %664 = vmatprep.subr.mxu0 0.0
    %665 = vmatpush1.msra.mxu0 0.0
    %666 = vmatprep.subr.mxu0 0.0
    %667 = vmatpush1.msra.mxu0 0.0
    %668 = vmatprep.subr.mxu0 0.0
    %669 = vmatpush1.msra.mxu0 0.0
    %670 = vmatprep.subr.mxu0 0.0
    %671 = vmatpush1.msra.mxu0 0.0
    %672 = vmatprep.subr.mxu0 0.0
    %673 = vmatpush1.msra.mxu0 0.0
    %674 = vmatprep.subr.mxu0 0.0
    %675 = vmatpush1.msra.mxu0 0.0
    %676 = vmatprep.subr.mxu0 0.0
    %677 = vmatpush1.msra.mxu0 0.0
    %678 = vmatprep.subr.mxu0 0.0
    %679 = vmatpush1.msra.mxu0 0.0
    %680 = vmatprep.subr.mxu0 0.0
    %681 = vmatpush1.msra.mxu0 0.0
    %682 = vmatprep.subr.mxu0 0.0
    %683 = vmatpush1.msra.mxu0 0.0
    %684 = vmatprep.subr.mxu0 0.0
    %685 = vmatpush1.msra.mxu0 0.0
    %686 = vmatprep.subr.mxu0 0.0
    %687 = vmatpush1.msra.mxu0 0.0
    %688 = vmatprep.subr.mxu0 0.0
    %689 = vmatpush1.msra.mxu0 0.0
    %690 = vmatprep.subr.mxu0 0.0
    %691 = vmatpush1.msra.mxu0 0.0
    %692 = vmatprep.subr.mxu0 0.0
    %693 = vmatpush1.msra.mxu0 0.0
    %694 = vmatprep.subr.mxu0 0.0
    %695 = vmatpush1.msra.mxu0 0.0
    %696 = vmatprep.subr.mxu0 0.0
    %697 = vmatpush1.msra.mxu0 0.0
    %698 = vmatprep.subr.mxu0 0.0
    %699 = vmatpush1.msra.mxu0 0.0
    %700 = vmatprep.subr.mxu0 0.0
    %701 = vmatpush1.msra.mxu0 0.0
    %702 = vmatprep.subr.mxu0 0.0
    %703 = vmatpush1.msra.mxu0 0.0
    %704 = vmatprep.subr.mxu0 0.0
    %705 = vmatpush1.msra.mxu0 0.0
    %706 = vmatprep.subr.mxu0 0.0
    %707 = vmatpush1.msra.mxu0 0.0
    %708 = vmatprep.mubr.f32.mxu0 0.0
    %709 = vmatmul.mubr.f32.gmra.mrb[0].mxu0 %v642
    %v710 = vpop.f32.mrb[0].mxu0
    %v711 = vadd.f32 0.0, %v710
    %v712 = vpop.f32.mrb[0].mxu0
    %713 = vdwg.mxu0
    %v714 = vadd.f32 %v637, %v711
    %v715 = vxor.u32 %v714, 2147483648
    %v716 = vmul.f32 %v715, 1.442695
    %v717 = vpow.pop %v716
    %v718 = vadd.f32 %v717, 1.0
    %v719 = vrcp.pop %v718
    %v720 = vmul.f32 1.0, %v719
    %v721 = vtanh.pop %v714
    %v722 = vmul.f32 %v720, %v623
    %724 = vrot.lane.b32.xlu0 %v721, 64
    %v725 = vpop.permute.xlu0 %724
    %v727 = vmul.f32 %v720, %v725
    %729 = vrot.lane.b32.xlu0 %v727, 32
    %v730 = vpop.permute.xlu0 %729
    %v732 = vadd.f32 %v722, %v730
    %v733 = vtanh.pop %v732
    %735 = vrot.lane.b32.xlu0 %v733, 64
    %v736 = vpop.permute.xlu0 %735
    %v738 = vmul.f32 %v720, %v736
    %740 = vrot.lane.b32.xlu0 %v738, 32
    %v741 = vpop.permute.xlu0 %740
    %s743 = scalar_lea.vmem [#allocation3], 32
    %744 = vst.msk [vmem:[%s743] sm:$0xff] %vm63, %v741
    %s745 = scalar_lea.vmem [#allocation2], 40
    %v746 = vld [vmem:[%s745] sm:$0xff]
    %v747 = vld [vmem:[%s2] sm:$0xff]
    %v748 = vld [vmem:[%s2 + $0x8] sm:$0xff]
    %v749 = vld [vmem:[%s2 + $0x10] sm:$0xff]
    %v750 = vld [vmem:[%s2 + $0x18] sm:$0xff]
    %v751 = vsel %vm63, %v741, 0
    %753 = vmatprep.subr.mxu0 0.0
    %754 = vmatpush1.msra.mxu0 %v747
    %755 = vmatprep.subr.mxu0 0.0
    %756 = vmatpush1.msra.mxu0 %v748
    %757 = vmatprep.subr.mxu0 0.0
    %758 = vmatpush1.msra.mxu0 %v749
    %759 = vmatprep.subr.mxu0 0.0
    %760 = vmatpush1.msra.mxu0 %v750
    %761 = vmatprep.subr.mxu0 0.0
    %762 = vmatpush1.msra.mxu0 0.0
    %763 = vmatprep.subr.mxu0 0.0
    %764 = vmatpush1.msra.mxu0 0.0
    %765 = vmatprep.subr.mxu0 0.0
    %766 = vmatpush1.msra.mxu0 0.0
    %767 = vmatprep.subr.mxu0 0.0
    %768 = vmatpush1.msra.mxu0 0.0
    %769 = vmatprep.subr.mxu0 0.0
    %770 = vmatpush1.msra.mxu0 0.0
    %771 = vmatprep.subr.mxu0 0.0
    %772 = vmatpush1.msra.mxu0 0.0
    %773 = vmatprep.subr.mxu0 0.0
    %774 = vmatpush1.msra.mxu0 0.0
    %775 = vmatprep.subr.mxu0 0.0
    %776 = vmatpush1.msra.mxu0 0.0
    %777 = vmatprep.subr.mxu0 0.0
    %778 = vmatpush1.msra.mxu0 0.0
    %779 = vmatprep.subr.mxu0 0.0
    %780 = vmatpush1.msra.mxu0 0.0
    %781 = vmatprep.subr.mxu0 0.0
    %782 = vmatpush1.msra.mxu0 0.0
    %783 = vmatprep.subr.mxu0 0.0
    %784 = vmatpush1.msra.mxu0 0.0
    %785 = vmatprep.subr.mxu0 0.0
    %786 = vmatpush1.msra.mxu0 0.0
    %787 = vmatprep.subr.mxu0 0.0
    %788 = vmatpush1.msra.mxu0 0.0
    %789 = vmatprep.subr.mxu0 0.0
    %790 = vmatpush1.msra.mxu0 0.0
    %791 = vmatprep.subr.mxu0 0.0
    %792 = vmatpush1.msra.mxu0 0.0
    %793 = vmatprep.subr.mxu0 0.0
    %794 = vmatpush1.msra.mxu0 0.0
    %795 = vmatprep.subr.mxu0 0.0
    %796 = vmatpush1.msra.mxu0 0.0
    %797 = vmatprep.subr.mxu0 0.0
    %798 = vmatpush1.msra.mxu0 0.0
    %799 = vmatprep.subr.mxu0 0.0
    %800 = vmatpush1.msra.mxu0 0.0
    %801 = vmatprep.subr.mxu0 0.0
    %802 = vmatpush1.msra.mxu0 0.0
    %803 = vmatprep.subr.mxu0 0.0
    %804 = vmatpush1.msra.mxu0 0.0
    %805 = vmatprep.subr.mxu0 0.0
    %806 = vmatpush1.msra.mxu0 0.0
    %807 = vmatprep.subr.mxu0 0.0
    %808 = vmatpush1.msra.mxu0 0.0
    %809 = vmatprep.subr.mxu0 0.0
    %810 = vmatpush1.msra.mxu0 0.0
    %811 = vmatprep.subr.mxu0 0.0
    %812 = vmatpush1.msra.mxu0 0.0
    %813 = vmatprep.subr.mxu0 0.0
    %814 = vmatpush1.msra.mxu0 0.0
    %815 = vmatprep.subr.mxu0 0.0
    %816 = vmatpush1.msra.mxu0 0.0
    %817 = vmatprep.mubr.f32.mxu0 0.0
    %818 = vmatmul.mubr.f32.gmra.mrb[0].mxu0 %v751
    %v819 = vpop.f32.mrb[0].mxu0
    %v820 = vadd.f32 0.0, %v819
    %v821 = vpop.f32.mrb[0].mxu0
    %822 = vdwg.mxu0
    %v823 = vadd.f32 %v746, %v820
    %v824 = vxor.u32 %v823, 2147483648
    %v825 = vmul.f32 %v824, 1.442695
    %v826 = vpow.pop %v825
    %v827 = vadd.f32 %v826, 1.0
    %v828 = vrcp.pop %v827
    %v829 = vmul.f32 1.0, %v828
    %v830 = vtanh.pop %v823
    %v831 = vmul.f32 %v829, %v732
    %833 = vrot.lane.b32.xlu0 %v830, 64
    %v834 = vpop.permute.xlu0 %833
    %v836 = vmul.f32 %v829, %v834
    %838 = vrot.lane.b32.xlu0 %v836, 32
    %v839 = vpop.permute.xlu0 %838
    %v841 = vadd.f32 %v831, %v839
    %v842 = vtanh.pop %v841
    %844 = vrot.lane.b32.xlu0 %v842, 64
    %v845 = vpop.permute.xlu0 %844
    %v847 = vmul.f32 %v829, %v845
    %849 = vrot.lane.b32.xlu0 %v847, 32
    %v850 = vpop.permute.xlu0 %849
    %s852 = scalar_lea.vmem [#allocation3], 40
    %853 = vst.msk [vmem:[%s852] sm:$0xff] %vm63, %v850
    %s854 = scalar_lea.vmem [#allocation2], 48
    %v855 = vld [vmem:[%s854] sm:$0xff]
    %v856 = vld [vmem:[%s2] sm:$0xff]
    %v857 = vld [vmem:[%s2 + $0x8] sm:$0xff]
    %v858 = vld [vmem:[%s2 + $0x10] sm:$0xff]
    %v859 = vld [vmem:[%s2 + $0x18] sm:$0xff]
    %v860 = vsel %vm63, %v850, 0
    %862 = vmatprep.subr.mxu0 0.0
    %863 = vmatpush1.msra.mxu0 %v856
    %864 = vmatprep.subr.mxu0 0.0
    %865 = vmatpush1.msra.mxu0 %v857
    %866 = vmatprep.subr.mxu0 0.0
    %867 = vmatpush1.msra.mxu0 %v858
    %868 = vmatprep.subr.mxu0 0.0
    %869 = vmatpush1.msra.mxu0 %v859
    %870 = vmatprep.subr.mxu0 0.0
    %871 = vmatpush1.msra.mxu0 0.0
    %872 = vmatprep.subr.mxu0 0.0
    %873 = vmatpush1.msra.mxu0 0.0
    %874 = vmatprep.subr.mxu0 0.0
    %875 = vmatpush1.msra.mxu0 0.0
    %876 = vmatprep.subr.mxu0 0.0
    %877 = vmatpush1.msra.mxu0 0.0
    %878 = vmatprep.subr.mxu0 0.0
    %879 = vmatpush1.msra.mxu0 0.0
    %880 = vmatprep.subr.mxu0 0.0
    %881 = vmatpush1.msra.mxu0 0.0
    %882 = vmatprep.subr.mxu0 0.0
    %883 = vmatpush1.msra.mxu0 0.0
    %884 = vmatprep.subr.mxu0 0.0
    %885 = vmatpush1.msra.mxu0 0.0
    %886 = vmatprep.subr.mxu0 0.0
    %887 = vmatpush1.msra.mxu0 0.0
    %888 = vmatprep.subr.mxu0 0.0
    %889 = vmatpush1.msra.mxu0 0.0
    %890 = vmatprep.subr.mxu0 0.0
    %891 = vmatpush1.msra.mxu0 0.0
    %892 = vmatprep.subr.mxu0 0.0
    %893 = vmatpush1.msra.mxu0 0.0
    %894 = vmatprep.subr.mxu0 0.0
    %895 = vmatpush1.msra.mxu0 0.0
    %896 = vmatprep.subr.mxu0 0.0
    %897 = vmatpush1.msra.mxu0 0.0
    %898 = vmatprep.subr.mxu0 0.0
    %899 = vmatpush1.msra.mxu0 0.0
    %900 = vmatprep.subr.mxu0 0.0
    %901 = vmatpush1.msra.mxu0 0.0
    %902 = vmatprep.subr.mxu0 0.0
    %903 = vmatpush1.msra.mxu0 0.0
    %904 = vmatprep.subr.mxu0 0.0
    %905 = vmatpush1.msra.mxu0 0.0
    %906 = vmatprep.subr.mxu0 0.0
    %907 = vmatpush1.msra.mxu0 0.0
    %908 = vmatprep.subr.mxu0 0.0
    %909 = vmatpush1.msra.mxu0 0.0
    %910 = vmatprep.subr.mxu0 0.0
    %911 = vmatpush1.msra.mxu0 0.0
    %912 = vmatprep.subr.mxu0 0.0
    %913 = vmatpush1.msra.mxu0 0.0
    %914 = vmatprep.subr.mxu0 0.0
    %915 = vmatpush1.msra.mxu0 0.0
    %916 = vmatprep.subr.mxu0 0.0
    %917 = vmatpush1.msra.mxu0 0.0
    %918 = vmatprep.subr.mxu0 0.0
    %919 = vmatpush1.msra.mxu0 0.0
    %920 = vmatprep.subr.mxu0 0.0
    %921 = vmatpush1.msra.mxu0 0.0
    %922 = vmatprep.subr.mxu0 0.0
    %923 = vmatpush1.msra.mxu0 0.0
    %924 = vmatprep.subr.mxu0 0.0
    %925 = vmatpush1.msra.mxu0 0.0
    %926 = vmatprep.mubr.f32.mxu0 0.0
    %927 = vmatmul.mubr.f32.gmra.mrb[0].mxu0 %v860
    %v928 = vpop.f32.mrb[0].mxu0
    %v929 = vadd.f32 0.0, %v928
    %v930 = vpop.f32.mrb[0].mxu0
    %931 = vdwg.mxu0
    %v932 = vadd.f32 %v855, %v929
    %v933 = vxor.u32 %v932, 2147483648
    %v934 = vmul.f32 %v933, 1.442695
    %v935 = vpow.pop %v934
    %v936 = vadd.f32 %v935, 1.0
    %v937 = vrcp.pop %v936
    %v938 = vmul.f32 1.0, %v937
    %v939 = vtanh.pop %v932
    %v940 = vmul.f32 %v938, %v841
    %942 = vrot.lane.b32.xlu0 %v939, 64
    %v943 = vpop.permute.xlu0 %942
    %v945 = vmul.f32 %v938, %v943
    %947 = vrot.lane.b32.xlu0 %v945, 32
    %v948 = vpop.permute.xlu0 %947
    %v950 = vadd.f32 %v940, %v948
    %v951 = vtanh.pop %v950
    %953 = vrot.lane.b32.xlu0 %v951, 64
    %v954 = vpop.permute.xlu0 %953
    %v956 = vmul.f32 %v938, %v954
    %958 = vrot.lane.b32.xlu0 %v956, 32
    %v959 = vpop.permute.xlu0 %958
    %s961 = scalar_lea.vmem [#allocation3], 48
    %962 = vst.msk [vmem:[%s961] sm:$0xff] %vm63, %v959
    %s963 = scalar_lea.vmem [#allocation2], 56
    %v964 = vld [vmem:[%s963] sm:$0xff]
    %v965 = vld [vmem:[%s2] sm:$0xff]
    %v966 = vld [vmem:[%s2 + $0x8] sm:$0xff]
    %v967 = vld [vmem:[%s2 + $0x10] sm:$0xff]
    %v968 = vld [vmem:[%s2 + $0x18] sm:$0xff]
    %v969 = vsel %vm63, %v959, 0
    %971 = vmatprep.subr.mxu0 0.0
    %972 = vmatpush1.msra.mxu0 %v965
    %973 = vmatprep.subr.mxu0 0.0
    %974 = vmatpush1.msra.mxu0 %v966
    %975 = vmatprep.subr.mxu0 0.0
    %976 = vmatpush1.msra.mxu0 %v967
    %977 = vmatprep.subr.mxu0 0.0
    %978 = vmatpush1.msra.mxu0 %v968
    %979 = vmatprep.subr.mxu0 0.0
    %980 = vmatpush1.msra.mxu0 0.0
    %981 = vmatprep.subr.mxu0 0.0
    %982 = vmatpush1.msra.mxu0 0.0
    %983 = vmatprep.subr.mxu0 0.0
    %984 = vmatpush1.msra.mxu0 0.0
    %985 = vmatprep.subr.mxu0 0.0
    %986 = vmatpush1.msra.mxu0 0.0
    %987 = vmatprep.subr.mxu0 0.0
    %988 = vmatpush1.msra.mxu0 0.0
    %989 = vmatprep.subr.mxu0 0.0
    %990 = vmatpush1.msra.mxu0 0.0
    %991 = vmatprep.subr.mxu0 0.0
    %992 = vmatpush1.msra.mxu0 0.0
    %993 = vmatprep.subr.mxu0 0.0
    %994 = vmatpush1.msra.mxu0 0.0
    %995 = vmatprep.subr.mxu0 0.0
    %996 = vmatpush1.msra.mxu0 0.0
    %997 = vmatprep.subr.mxu0 0.0
    %998 = vmatpush1.msra.mxu0 0.0
    %999 = vmatprep.subr.mxu0 0.0
    %1000 = vmatpush1.msra.mxu0 0.0
    %1001 = vmatprep.subr.mxu0 0.0
    %1002 = vmatpush1.msra.mxu0 0.0
    %1003 = vmatprep.subr.mxu0 0.0
    %1004 = vmatpush1.msra.mxu0 0.0
    %1005 = vmatprep.subr.mxu0 0.0
    %1006 = vmatpush1.msra.mxu0 0.0
    %1007 = vmatprep.subr.mxu0 0.0
    %1008 = vmatpush1.msra.mxu0 0.0
    %1009 = vmatprep.subr.mxu0 0.0
    %1010 = vmatpush1.msra.mxu0 0.0
    %1011 = vmatprep.subr.mxu0 0.0
    %1012 = vmatpush1.msra.mxu0 0.0
    %1013 = vmatprep.subr.mxu0 0.0
    %1014 = vmatpush1.msra.mxu0 0.0
    %1015 = vmatprep.subr.mxu0 0.0
    %1016 = vmatpush1.msra.mxu0 0.0
    %1017 = vmatprep.subr.mxu0 0.0
    %1018 = vmatpush1.msra.mxu0 0.0
    %1019 = vmatprep.subr.mxu0 0.0
    %1020 = vmatpush1.msra.mxu0 0.0
    %1021 = vmatprep.subr.mxu0 0.0
    %1022 = vmatpush1.msra.mxu0 0.0
    %1023 = vmatprep.subr.mxu0 0.0
    %1024 = vmatpush1.msra.mxu0 0.0
    %1025 = vmatprep.subr.mxu0 0.0
    %1026 = vmatpush1.msra.mxu0 0.0
    %1027 = vmatprep.subr.mxu0 0.0
    %1028 = vmatpush1.msra.mxu0 0.0
    %1029 = vmatprep.subr.mxu0 0.0
    %1030 = vmatpush1.msra.mxu0 0.0
    %1031 = vmatprep.subr.mxu0 0.0
    %1032 = vmatpush1.msra.mxu0 0.0
    %1033 = vmatprep.subr.mxu0 0.0
    %1034 = vmatpush1.msra.mxu0 0.0
    %1035 = vmatprep.mubr.f32.mxu0 0.0
    %1036 = vmatmul.mubr.f32.gmra.mrb[0].mxu0 %v969
    %v1037 = vpop.f32.mrb[0].mxu0
    %v1038 = vadd.f32 0.0, %v1037
    %v1039 = vpop.f32.mrb[0].mxu0
    %1040 = vdwg.mxu0
    %v1041 = vadd.f32 %v964, %v1038
    %v1042 = vxor.u32 %v1041, 2147483648
    %v1043 = vmul.f32 %v1042, 1.442695
    %v1044 = vpow.pop %v1043
    %v1045 = vadd.f32 %v1044, 1.0
    %v1046 = vrcp.pop %v1045
    %v1047 = vmul.f32 1.0, %v1046
    %v1048 = vtanh.pop %v1041
    %v1049 = vmul.f32 %v1047, %v950
    %1051 = vrot.lane.b32.xlu0 %v1048, 64
    %v1052 = vpop.permute.xlu0 %1051
    %v1054 = vmul.f32 %v1047, %v1052
    %1056 = vrot.lane.b32.xlu0 %v1054, 32
    %v1057 = vpop.permute.xlu0 %1056
    %v1059 = vadd.f32 %v1049, %v1057
    %v1060 = vtanh.pop %v1059
    %1062 = vrot.lane.b32.xlu0 %v1060, 64
    %v1063 = vpop.permute.xlu0 %1062
    %v1065 = vmul.f32 %v1047, %v1063
    %1067 = vrot.lane.b32.xlu0 %v1065, 32
    %v1068 = vpop.permute.xlu0 %1067
    %s1070 = scalar_lea.vmem [#allocation3], 56
    %1071 = vst.msk [vmem:[%s1070] sm:$0xff] %vm63, %v1068
    %1072 = vst.msk [vmem:[#allocation7] sm:$0xff] %vm63, %v1068
    %1074 = vrot.lane.b32.xlu0 %v1059, 96
    %v1075 = vpop.permute.xlu0 %1074
    %1077 = vst.msk [vmem:[#allocation8] sm:$0xff] %vm63, %v1075
    %v1078 = vld [vmem:[#allocation3] sm:$0xff]
    %v1079 = vld [vmem:[#allocation3 + $0x8] sm:$0xff]
    %v1080 = vld [vmem:[#allocation3 + $0x10] sm:$0xff]
    %v1081 = vld [vmem:[#allocation3 + $0x18] sm:$0xff]
    %v1082 = vld [vmem:[#allocation3 + $0x20] sm:$0xff]
    %v1083 = vld [vmem:[#allocation3 + $0x28] sm:$0xff]
    %v1084 = vld [vmem:[#allocation3 + $0x30] sm:$0xff]
    %v1085 = vld [vmem:[#allocation3 + $0x38] sm:$0xff]
    %v1086 = vld [vmem:[%s4] sm:$0xff]
    %v1087 = vld [vmem:[%s4 + $0x8] sm:$0xff]
    %v1088 = vld [vmem:[%s4 + $0x10] sm:$0xff]
    %v1089 = vld [vmem:[%s4 + $0x18] sm:$0xff]
    %v1090 = vld [vmem:[%s6] sm:$0x1]
    %v1092 = vlaneseq
    %v1093 = vshrl.u32 %v1092, 7
    %v1094 = vsub.s32 0, %v1093
    %v1095 = vrot.slane %v1090, %v1094
    %v1098 = vsel %vm63, %v1078, 0
    %v1101 = vsel %vm63, %v1079, 0
    %v1104 = vsel %vm63, %v1080, 0
    %v1107 = vsel %vm63, %v1081, 0
    %v1110 = vsel %vm63, %v1082, 0
    %v1113 = vsel %vm63, %v1083, 0
    %v1116 = vsel %vm63, %v1084, 0
    %v1119 = vsel %vm63, %v1085, 0
    %1121 = vmatprep.subr.mxu0 0.0
    %1122 = vmatpush1.msra.mxu0 %v1086
    %1123 = vmatprep.subr.mxu0 0.0
    %1124 = vmatpush1.msra.mxu0 %v1087
    %1125 = vmatprep.subr.mxu0 0.0
    %1126 = vmatpush1.msra.mxu0 %v1088
    %1127 = vmatprep.subr.mxu0 0.0
    %1128 = vmatpush1.msra.mxu0 %v1089
    %1129 = vmatprep.subr.mxu0 0.0
    %1130 = vmatpush1.msra.mxu0 0.0
    %1131 = vmatprep.subr.mxu0 0.0
    %1132 = vmatpush1.msra.mxu0 0.0
    %1133 = vmatprep.subr.mxu0 0.0
    %1134 = vmatpush1.msra.mxu0 0.0
    %1135 = vmatprep.subr.mxu0 0.0
    %1136 = vmatpush1.msra.mxu0 0.0
    %1137 = vmatprep.subr.mxu0 0.0
    %1138 = vmatpush1.msra.mxu0 0.0
    %1139 = vmatprep.subr.mxu0 0.0
    %1140 = vmatpush1.msra.mxu0 0.0
    %1141 = vmatprep.subr.mxu0 0.0
    %1142 = vmatpush1.msra.mxu0 0.0
    %1143 = vmatprep.subr.mxu0 0.0
    %1144 = vmatpush1.msra.mxu0 0.0
    %1145 = vmatprep.subr.mxu0 0.0
    %1146 = vmatpush1.msra.mxu0 0.0
    %1147 = vmatprep.subr.mxu0 0.0
    %1148 = vmatpush1.msra.mxu0 0.0
    %1149 = vmatprep.subr.mxu0 0.0
    %1150 = vmatpush1.msra.mxu0 0.0
    %1151 = vmatprep.subr.mxu0 0.0
    %1152 = vmatpush1.msra.mxu0 0.0
    %1153 = vmatprep.subr.mxu0 0.0
    %1154 = vmatpush1.msra.mxu0 0.0
    %1155 = vmatprep.subr.mxu0 0.0
    %1156 = vmatpush1.msra.mxu0 0.0
    %1157 = vmatprep.subr.mxu0 0.0
    %1158 = vmatpush1.msra.mxu0 0.0
    %1159 = vmatprep.subr.mxu0 0.0
    %1160 = vmatpush1.msra.mxu0 0.0
    %1161 = vmatprep.subr.mxu0 0.0
    %1162 = vmatpush1.msra.mxu0 0.0
    %1163 = vmatprep.subr.mxu0 0.0
    %1164 = vmatpush1.msra.mxu0 0.0
    %1165 = vmatprep.subr.mxu0 0.0
    %1166 = vmatpush1.msra.mxu0 0.0
    %1167 = vmatprep.subr.mxu0 0.0
    %1168 = vmatpush1.msra.mxu0 0.0
    %1169 = vmatprep.subr.mxu0 0.0
    %1170 = vmatpush1.msra.mxu0 0.0
    %1171 = vmatprep.subr.mxu0 0.0
    %1172 = vmatpush1.msra.mxu0 0.0
    %1173 = vmatprep.subr.mxu0 0.0
    %1174 = vmatpush1.msra.mxu0 0.0
    %1175 = vmatprep.subr.mxu0 0.0
    %1176 = vmatpush1.msra.mxu0 0.0
    %1177 = vmatprep.subr.mxu0 0.0
    %1178 = vmatpush1.msra.mxu0 0.0
    %1179 = vmatprep.subr.mxu0 0.0
    %1180 = vmatpush1.msra.mxu0 0.0
    %1181 = vmatprep.subr.mxu0 0.0
    %1182 = vmatpush1.msra.mxu0 0.0
    %1183 = vmatprep.subr.mxu0 0.0
    %1184 = vmatpush1.msra.mxu0 0.0
    %1185 = vmatprep.mubr.f32.mxu0 0.0
    %1186 = vmatmul.mubr.f32.gmra.mrb[0].mxu0 %v1098
    %v1187 = vpop.f32.mrb[0].mxu0
    %v1188 = vadd.f32 %v1095, %v1187
    %v1189 = vpop.f32.mrb[0].mxu0
    %1190 = vmatprep.mubr.f32.mxu0 0.0
    %1191 = vmatmul.mubr.f32.gmra.mrb[0].mxu0 %v1101
    %v1192 = vpop.f32.mrb[0].mxu0
    %v1193 = vadd.f32 %v1095, %v1192
    %v1194 = vpop.f32.mrb[0].mxu0
    %1195 = vmatprep.mubr.f32.mxu0 0.0
    %1196 = vmatmul.mubr.f32.gmra.mrb[0].mxu0 %v1104
    %v1197 = vpop.f32.mrb[0].mxu0
    %v1198 = vadd.f32 %v1095, %v1197
    %v1199 = vpop.f32.mrb[0].mxu0
    %1200 = vmatprep.mubr.f32.mxu0 0.0
    %1201 = vmatmul.mubr.f32.gmra.mrb[0].mxu0 %v1107
    %v1202 = vpop.f32.mrb[0].mxu0
    %v1203 = vadd.f32 %v1095, %v1202
    %v1204 = vpop.f32.mrb[0].mxu0
    %1205 = vmatprep.mubr.f32.mxu0 0.0
    %1206 = vmatmul.mubr.f32.gmra.mrb[0].mxu0 %v1110
    %v1207 = vpop.f32.mrb[0].mxu0
    %v1208 = vadd.f32 %v1095, %v1207
    %v1209 = vpop.f32.mrb[0].mxu0
    %1210 = vmatprep.mubr.f32.mxu0 0.0
    %1211 = vmatmul.mubr.f32.gmra.mrb[0].mxu0 %v1113
    %v1212 = vpop.f32.mrb[0].mxu0
    %v1213 = vadd.f32 %v1095, %v1212
    %v1214 = vpop.f32.mrb[0].mxu0
    %1215 = vmatprep.mubr.f32.mxu0 0.0
    %1216 = vmatmul.mubr.f32.gmra.mrb[0].mxu0 %v1116
    %v1217 = vpop.f32.mrb[0].mxu0
    %v1218 = vadd.f32 %v1095, %v1217
    %v1219 = vpop.f32.mrb[0].mxu0
    %1220 = vmatprep.mubr.f32.mxu0 0.0
    %1221 = vmatmul.mubr.f32.gmra.mrb[0].mxu0 %v1119
    %v1222 = vpop.f32.mrb[0].mxu0
    %v1223 = vadd.f32 %v1095, %v1222
    %v1224 = vpop.f32.mrb[0].mxu0
    %1225 = vdwg.mxu0
    %1226 = vst [vmem:[#allocation2] sm:$0xff] %v1188
    %1227 = vst [vmem:[#allocation2 + $0x8] sm:$0xff] %v1193
    %1228 = vst [vmem:[#allocation2 + $0x10] sm:$0xff] %v1198
    %1229 = vst [vmem:[#allocation2 + $0x18] sm:$0xff] %v1203
    %1230 = vst [vmem:[#allocation2 + $0x20] sm:$0xff] %v1208
    %1231 = vst [vmem:[#allocation2 + $0x28] sm:$0xff] %v1213
    %1232 = vst [vmem:[#allocation2 + $0x30] sm:$0xff] %v1218
    %1233 = vst [vmem:[#allocation2 + $0x38] sm:$0xff] %v1223
    %v1234 = vld [vmem:[#allocation2] sm:$0xff]
    %v1235 = vld [vmem:[#allocation4] sm:$0xff]
    %v1236 = vld [vmem:[#allocation4 + $0x8] sm:$0xff]
    %v1237 = vld [vmem:[#allocation4 + $0x10] sm:$0xff]
    %v1238 = vld [vmem:[#allocation4 + $0x18] sm:$0xff]
    %1239 = vmatprep.subr.mxu0 0.0
    %1240 = vmatpush1.msra.mxu0 %v1235
    %1241 = vmatprep.subr.mxu0 0.0
    %1242 = vmatpush1.msra.mxu0 %v1236
    %1243 = vmatprep.subr.mxu0 0.0
    %1244 = vmatpush1.msra.mxu0 %v1237
    %1245 = vmatprep.subr.mxu0 0.0
    %1246 = vmatpush1.msra.mxu0 %v1238
    %1247 = vmatprep.subr.mxu0 0.0
    %1248 = vmatpush1.msra.mxu0 0.0
    %1249 = vmatprep.subr.mxu0 0.0
    %1250 = vmatpush1.msra.mxu0 0.0
    %1251 = vmatprep.subr.mxu0 0.0
    %1252 = vmatpush1.msra.mxu0 0.0
    %1253 = vmatprep.subr.mxu0 0.0
    %1254 = vmatpush1.msra.mxu0 0.0
    %1255 = vmatprep.subr.mxu0 0.0
    %1256 = vmatpush1.msra.mxu0 0.0
    %1257 = vmatprep.subr.mxu0 0.0
    %1258 = vmatpush1.msra.mxu0 0.0
    %1259 = vmatprep.subr.mxu0 0.0
    %1260 = vmatpush1.msra.mxu0 0.0
    %1261 = vmatprep.subr.mxu0 0.0
    %1262 = vmatpush1.msra.mxu0 0.0
    %1263 = vmatprep.subr.mxu0 0.0
    %1264 = vmatpush1.msra.mxu0 0.0
    %1265 = vmatprep.subr.mxu0 0.0
    %1266 = vmatpush1.msra.mxu0 0.0
    %1267 = vmatprep.subr.mxu0 0.0
    %1268 = vmatpush1.msra.mxu0 0.0
    %1269 = vmatprep.subr.mxu0 0.0
    %1270 = vmatpush1.msra.mxu0 0.0
    %1271 = vmatprep.subr.mxu0 0.0
    %1272 = vmatpush1.msra.mxu0 0.0
    %1273 = vmatprep.subr.mxu0 0.0
    %1274 = vmatpush1.msra.mxu0 0.0
    %1275 = vmatprep.subr.mxu0 0.0
    %1276 = vmatpush1.msra.mxu0 0.0
    %1277 = vmatprep.subr.mxu0 0.0
    %1278 = vmatpush1.msra.mxu0 0.0
    %1279 = vmatprep.subr.mxu0 0.0
    %1280 = vmatpush1.msra.mxu0 0.0
    %1281 = vmatprep.subr.mxu0 0.0
    %1282 = vmatpush1.msra.mxu0 0.0
    %1283 = vmatprep.subr.mxu0 0.0
    %1284 = vmatpush1.msra.mxu0 0.0
    %1285 = vmatprep.subr.mxu0 0.0
    %1286 = vmatpush1.msra.mxu0 0.0
    %1287 = vmatprep.subr.mxu0 0.0
    %1288 = vmatpush1.msra.mxu0 0.0
    %1289 = vmatprep.subr.mxu0 0.0
    %1290 = vmatpush1.msra.mxu0 0.0
    %1291 = vmatprep.subr.mxu0 0.0
    %1292 = vmatpush1.msra.mxu0 0.0
    %1293 = vmatprep.subr.mxu0 0.0
    %1294 = vmatpush1.msra.mxu0 0.0
    %1295 = vmatprep.subr.mxu0 0.0
    %1296 = vmatpush1.msra.mxu0 0.0
    %1297 = vmatprep.subr.mxu0 0.0
    %1298 = vmatpush1.msra.mxu0 0.0
    %1299 = vmatprep.subr.mxu0 0.0
    %1300 = vmatpush1.msra.mxu0 0.0
    %1301 = vmatprep.subr.mxu0 0.0
    %1302 = vmatpush1.msra.mxu0 0.0
    %1303 = vmatprep.mubr.f32.mxu0 0.0
    %1304 = vmatmul.mubr.f32.gmra.mrb[0].mxu0 %v207
    %v1305 = vpop.f32.mrb[0].mxu0
    %v1306 = vadd.f32 0.0, %v1305
    %v1307 = vpop.f32.mrb[0].mxu0
    %1308 = vdwg.mxu0
    %v1309 = vadd.f32 %v1234, %v1306
    %v1310 = vxor.u32 %v1309, 2147483648
    %v1311 = vmul.f32 %v1310, 1.442695
    %v1312 = vpow.pop %v1311
    %v1313 = vadd.f32 %v1312, 1.0
    %v1314 = vrcp.pop %v1313
    %v1315 = vmul.f32 1.0, %v1314
    %v1316 = vtanh.pop %v1309
    %v1317 = vmul.f32 %v1315, 0.0
    %1319 = vrot.lane.b32.xlu0 %v1316, 64
    %v1320 = vpop.permute.xlu0 %1319
    %v1322 = vmul.f32 %v1315, %v1320
    %1324 = vrot.lane.b32.xlu0 %v1322, 32
    %v1325 = vpop.permute.xlu0 %1324
    %v1327 = vadd.f32 %v1317, %v1325
    %v1328 = vtanh.pop %v1327
    %1330 = vrot.lane.b32.xlu0 %v1328, 64
    %v1331 = vpop.permute.xlu0 %1330
    %v1333 = vmul.f32 %v1315, %v1331
    %v1334 = vld [vmem:[%s309] sm:$0xff]
    %1336 = vrot.lane.b32.xlu0 %v1333, 32
    %v1337 = vpop.permute.xlu0 %1336
    %v1338 = vsel %vm63, %v1337, 0
    %1340 = vmatprep.subr.mxu0 0.0
    %1341 = vmatpush1.msra.mxu0 %v1235
    %1342 = vmatprep.subr.mxu0 0.0
    %1343 = vmatpush1.msra.mxu0 %v1236
    %1344 = vmatprep.subr.mxu0 0.0
    %1345 = vmatpush1.msra.mxu0 %v1237
    %1346 = vmatprep.subr.mxu0 0.0
    %1347 = vmatpush1.msra.mxu0 %v1238
    %1348 = vmatprep.subr.mxu0 0.0
    %1349 = vmatpush1.msra.mxu0 0.0
    %1350 = vmatprep.subr.mxu0 0.0
    %1351 = vmatpush1.msra.mxu0 0.0
    %1352 = vmatprep.subr.mxu0 0.0
    %1353 = vmatpush1.msra.mxu0 0.0
    %1354 = vmatprep.subr.mxu0 0.0
    %1355 = vmatpush1.msra.mxu0 0.0
    %1356 = vmatprep.subr.mxu0 0.0
    %1357 = vmatpush1.msra.mxu0 0.0
    %1358 = vmatprep.subr.mxu0 0.0
    %1359 = vmatpush1.msra.mxu0 0.0
    %1360 = vmatprep.subr.mxu0 0.0
    %1361 = vmatpush1.msra.mxu0 0.0
    %1362 = vmatprep.subr.mxu0 0.0
    %1363 = vmatpush1.msra.mxu0 0.0
    %1364 = vmatprep.subr.mxu0 0.0
    %1365 = vmatpush1.msra.mxu0 0.0
    %1366 = vmatprep.subr.mxu0 0.0
    %1367 = vmatpush1.msra.mxu0 0.0
    %1368 = vmatprep.subr.mxu0 0.0
    %1369 = vmatpush1.msra.mxu0 0.0
    %1370 = vmatprep.subr.mxu0 0.0
    %1371 = vmatpush1.msra.mxu0 0.0
    %1372 = vmatprep.subr.mxu0 0.0
    %1373 = vmatpush1.msra.mxu0 0.0
    %1374 = vmatprep.subr.mxu0 0.0
    %1375 = vmatpush1.msra.mxu0 0.0
    %1376 = vmatprep.subr.mxu0 0.0
    %1377 = vmatpush1.msra.mxu0 0.0
    %1378 = vmatprep.subr.mxu0 0.0
    %1379 = vmatpush1.msra.mxu0 0.0
    %1380 = vmatprep.subr.mxu0 0.0
    %1381 = vmatpush1.msra.mxu0 0.0
    %1382 = vmatprep.subr.mxu0 0.0
    %1383 = vmatpush1.msra.mxu0 0.0
    %1384 = vmatprep.subr.mxu0 0.0
    %1385 = vmatpush1.msra.mxu0 0.0
    %1386 = vmatprep.subr.mxu0 0.0
    %1387 = vmatpush1.msra.mxu0 0.0
    %1388 = vmatprep.subr.mxu0 0.0
    %1389 = vmatpush1.msra.mxu0 0.0
    %1390 = vmatprep.subr.mxu0 0.0
    %1391 = vmatpush1.msra.mxu0 0.0
    %1392 = vmatprep.subr.mxu0 0.0
    %1393 = vmatpush1.msra.mxu0 0.0
    %1394 = vmatprep.subr.mxu0 0.0
    %1395 = vmatpush1.msra.mxu0 0.0
    %1396 = vmatprep.subr.mxu0 0.0
    %1397 = vmatpush1.msra.mxu0 0.0
    %1398 = vmatprep.subr.mxu0 0.0
    %1399 = vmatpush1.msra.mxu0 0.0
    %1400 = vmatprep.subr.mxu0 0.0
    %1401 = vmatpush1.msra.mxu0 0.0
    %1402 = vmatprep.subr.mxu0 0.0
    %1403 = vmatpush1.msra.mxu0 0.0
    %1404 = vmatprep.mubr.f32.mxu0 0.0
    %1405 = vmatmul.mubr.f32.gmra.mrb[0].mxu0 %v1338
    %v1406 = vpop.f32.mrb[0].mxu0
    %v1407 = vadd.f32 0.0, %v1406
    %v1408 = vpop.f32.mrb[0].mxu0
    %1409 = vdwg.mxu0
    %v1410 = vadd.f32 %v1334, %v1407
    %v1411 = vxor.u32 %v1410, 2147483648
    %v1412 = vmul.f32 %v1411, 1.442695
    %v1413 = vpow.pop %v1412
    %v1414 = vadd.f32 %v1413, 1.0
    %v1415 = vrcp.pop %v1414
    %v1416 = vmul.f32 1.0, %v1415
    %v1417 = vtanh.pop %v1410
    %v1418 = vmul.f32 %v1416, %v1327
    %1420 = vrot.lane.b32.xlu0 %v1417, 64
    %v1421 = vpop.permute.xlu0 %1420
    %v1423 = vmul.f32 %v1416, %v1421
    %1425 = vrot.lane.b32.xlu0 %v1423, 32
    %v1426 = vpop.permute.xlu0 %1425
    %v1428 = vadd.f32 %v1418, %v1426
    %v1429 = vtanh.pop %v1428
    %1431 = vrot.lane.b32.xlu0 %v1429, 64
    %v1432 = vpop.permute.xlu0 %1431
    %v1434 = vmul.f32 %v1416, %v1432
    %v1435 = vld [vmem:[%s418] sm:$0xff]
    %1437 = vrot.lane.b32.xlu0 %v1434, 32
    %v1438 = vpop.permute.xlu0 %1437
    %v1439 = vsel %vm63, %v1438, 0
    %1441 = vmatprep.subr.mxu0 0.0
    %1442 = vmatpush1.msra.mxu0 %v1235
    %1443 = vmatprep.subr.mxu0 0.0
    %1444 = vmatpush1.msra.mxu0 %v1236
    %1445 = vmatprep.subr.mxu0 0.0
    %1446 = vmatpush1.msra.mxu0 %v1237
    %1447 = vmatprep.subr.mxu0 0.0
    %1448 = vmatpush1.msra.mxu0 %v1238
    %1449 = vmatprep.subr.mxu0 0.0
    %1450 = vmatpush1.msra.mxu0 0.0
    %1451 = vmatprep.subr.mxu0 0.0
    %1452 = vmatpush1.msra.mxu0 0.0
    %1453 = vmatprep.subr.mxu0 0.0
    %1454 = vmatpush1.msra.mxu0 0.0
    %1455 = vmatprep.subr.mxu0 0.0
    %1456 = vmatpush1.msra.mxu0 0.0
    %1457 = vmatprep.subr.mxu0 0.0
    %1458 = vmatpush1.msra.mxu0 0.0
    %1459 = vmatprep.subr.mxu0 0.0
    %1460 = vmatpush1.msra.mxu0 0.0
    %1461 = vmatprep.subr.mxu0 0.0
    %1462 = vmatpush1.msra.mxu0 0.0
    %1463 = vmatprep.subr.mxu0 0.0
    %1464 = vmatpush1.msra.mxu0 0.0
    %1465 = vmatprep.subr.mxu0 0.0
    %1466 = vmatpush1.msra.mxu0 0.0
    %1467 = vmatprep.subr.mxu0 0.0
    %1468 = vmatpush1.msra.mxu0 0.0
    %1469 = vmatprep.subr.mxu0 0.0
    %1470 = vmatpush1.msra.mxu0 0.0
    %1471 = vmatprep.subr.mxu0 0.0
    %1472 = vmatpush1.msra.mxu0 0.0
    %1473 = vmatprep.subr.mxu0 0.0
    %1474 = vmatpush1.msra.mxu0 0.0
    %1475 = vmatprep.subr.mxu0 0.0
    %1476 = vmatpush1.msra.mxu0 0.0
    %1477 = vmatprep.subr.mxu0 0.0
    %1478 = vmatpush1.msra.mxu0 0.0
    %1479 = vmatprep.subr.mxu0 0.0
    %1480 = vmatpush1.msra.mxu0 0.0
    %1481 = vmatprep.subr.mxu0 0.0
    %1482 = vmatpush1.msra.mxu0 0.0
    %1483 = vmatprep.subr.mxu0 0.0
    %1484 = vmatpush1.msra.mxu0 0.0
    %1485 = vmatprep.subr.mxu0 0.0
    %1486 = vmatpush1.msra.mxu0 0.0
    %1487 = vmatprep.subr.mxu0 0.0
    %1488 = vmatpush1.msra.mxu0 0.0
    %1489 = vmatprep.subr.mxu0 0.0
    %1490 = vmatpush1.msra.mxu0 0.0
    %1491 = vmatprep.subr.mxu0 0.0
    %1492 = vmatpush1.msra.mxu0 0.0
    %1493 = vmatprep.subr.mxu0 0.0
    %1494 = vmatpush1.msra.mxu0 0.0
    %1495 = vmatprep.subr.mxu0 0.0
    %1496 = vmatpush1.msra.mxu0 0.0
    %1497 = vmatprep.subr.mxu0 0.0
    %1498 = vmatpush1.msra.mxu0 0.0
    %1499 = vmatprep.subr.mxu0 0.0
    %1500 = vmatpush1.msra.mxu0 0.0
    %1501 = vmatprep.subr.mxu0 0.0
    %1502 = vmatpush1.msra.mxu0 0.0
    %1503 = vmatprep.subr.mxu0 0.0
    %1504 = vmatpush1.msra.mxu0 0.0
    %1505 = vmatprep.mubr.f32.mxu0 0.0
    %1506 = vmatmul.mubr.f32.gmra.mrb[0].mxu0 %v1439
    %v1507 = vpop.f32.mrb[0].mxu0
    %v1508 = vadd.f32 0.0, %v1507
    %v1509 = vpop.f32.mrb[0].mxu0
    %1510 = vdwg.mxu0
    %v1511 = vadd.f32 %v1435, %v1508
    %v1512 = vxor.u32 %v1511, 2147483648
    %v1513 = vmul.f32 %v1512, 1.442695
    %v1514 = vpow.pop %v1513
    %v1515 = vadd.f32 %v1514, 1.0
    %v1516 = vrcp.pop %v1515
    %v1517 = vmul.f32 1.0, %v1516
    %v1518 = vtanh.pop %v1511
    %v1519 = vmul.f32 %v1517, %v1428
    %1521 = vrot.lane.b32.xlu0 %v1518, 64
    %v1522 = vpop.permute.xlu0 %1521
    %v1524 = vmul.f32 %v1517, %v1522
    %1526 = vrot.lane.b32.xlu0 %v1524, 32
    %v1527 = vpop.permute.xlu0 %1526
    %v1529 = vadd.f32 %v1519, %v1527
    %v1530 = vtanh.pop %v1529
    %1532 = vrot.lane.b32.xlu0 %v1530, 64
    %v1533 = vpop.permute.xlu0 %1532
    %v1535 = vmul.f32 %v1517, %v1533
    %v1536 = vld [vmem:[%s527] sm:$0xff]
    %1538 = vrot.lane.b32.xlu0 %v1535, 32
    %v1539 = vpop.permute.xlu0 %1538
    %v1540 = vsel %vm63, %v1539, 0
    %1542 = vmatprep.subr.mxu0 0.0
    %1543 = vmatpush1.msra.mxu0 %v1235
    %1544 = vmatprep.subr.mxu0 0.0
    %1545 = vmatpush1.msra.mxu0 %v1236
    %1546 = vmatprep.subr.mxu0 0.0
    %1547 = vmatpush1.msra.mxu0 %v1237
    %1548 = vmatprep.subr.mxu0 0.0
    %1549 = vmatpush1.msra.mxu0 %v1238
    %1550 = vmatprep.subr.mxu0 0.0
    %1551 = vmatpush1.msra.mxu0 0.0
    %1552 = vmatprep.subr.mxu0 0.0
    %1553 = vmatpush1.msra.mxu0 0.0
    %1554 = vmatprep.subr.mxu0 0.0
    %1555 = vmatpush1.msra.mxu0 0.0
    %1556 = vmatprep.subr.mxu0 0.0
    %1557 = vmatpush1.msra.mxu0 0.0
    %1558 = vmatprep.subr.mxu0 0.0
    %1559 = vmatpush1.msra.mxu0 0.0
    %1560 = vmatprep.subr.mxu0 0.0
    %1561 = vmatpush1.msra.mxu0 0.0
    %1562 = vmatprep.subr.mxu0 0.0
    %1563 = vmatpush1.msra.mxu0 0.0
    %1564 = vmatprep.subr.mxu0 0.0
    %1565 = vmatpush1.msra.mxu0 0.0
    %1566 = vmatprep.subr.mxu0 0.0
    %1567 = vmatpush1.msra.mxu0 0.0
    %1568 = vmatprep.subr.mxu0 0.0
    %1569 = vmatpush1.msra.mxu0 0.0
    %1570 = vmatprep.subr.mxu0 0.0
    %1571 = vmatpush1.msra.mxu0 0.0
    %1572 = vmatprep.subr.mxu0 0.0
    %1573 = vmatpush1.msra.mxu0 0.0
    %1574 = vmatprep.subr.mxu0 0.0
    %1575 = vmatpush1.msra.mxu0 0.0
    %1576 = vmatprep.subr.mxu0 0.0
    %1577 = vmatpush1.msra.mxu0 0.0
    %1578 = vmatprep.subr.mxu0 0.0
    %1579 = vmatpush1.msra.mxu0 0.0
    %1580 = vmatprep.subr.mxu0 0.0
    %1581 = vmatpush1.msra.mxu0 0.0
    %1582 = vmatprep.subr.mxu0 0.0
    %1583 = vmatpush1.msra.mxu0 0.0
    %1584 = vmatprep.subr.mxu0 0.0
    %1585 = vmatpush1.msra.mxu0 0.0
    %1586 = vmatprep.subr.mxu0 0.0
    %1587 = vmatpush1.msra.mxu0 0.0
    %1588 = vmatprep.subr.mxu0 0.0
    %1589 = vmatpush1.msra.mxu0 0.0
    %1590 = vmatprep.subr.mxu0 0.0
    %1591 = vmatpush1.msra.mxu0 0.0
    %1592 = vmatprep.subr.mxu0 0.0
    %1593 = vmatpush1.msra.mxu0 0.0
    %1594 = vmatprep.subr.mxu0 0.0
    %1595 = vmatpush1.msra.mxu0 0.0
    %1596 = vmatprep.subr.mxu0 0.0
    %1597 = vmatpush1.msra.mxu0 0.0
    %1598 = vmatprep.subr.mxu0 0.0
    %1599 = vmatpush1.msra.mxu0 0.0
    %1600 = vmatprep.subr.mxu0 0.0
    %1601 = vmatpush1.msra.mxu0 0.0
    %1602 = vmatprep.subr.mxu0 0.0
    %1603 = vmatpush1.msra.mxu0 0.0
    %1604 = vmatprep.subr.mxu0 0.0
    %1605 = vmatpush1.msra.mxu0 0.0
    %1606 = vmatprep.mubr.f32.mxu0 0.0
    %1607 = vmatmul.mubr.f32.gmra.mrb[0].mxu0 %v1540
    %v1608 = vpop.f32.mrb[0].mxu0
    %v1609 = vadd.f32 0.0, %v1608
    %v1610 = vpop.f32.mrb[0].mxu0
    %1611 = vdwg.mxu0
    %v1612 = vadd.f32 %v1536, %v1609
    %v1613 = vxor.u32 %v1612, 2147483648
    %v1614 = vmul.f32 %v1613, 1.442695
    %v1615 = vpow.pop %v1614
    %v1616 = vadd.f32 %v1615, 1.0
    %v1617 = vrcp.pop %v1616
    %v1618 = vmul.f32 1.0, %v1617
    %v1619 = vtanh.pop %v1612
    %v1620 = vmul.f32 %v1618, %v1529
    %1622 = vrot.lane.b32.xlu0 %v1619, 64
    %v1623 = vpop.permute.xlu0 %1622
    %v1625 = vmul.f32 %v1618, %v1623
    %1627 = vrot.lane.b32.xlu0 %v1625, 32
    %v1628 = vpop.permute.xlu0 %1627
    %v1630 = vadd.f32 %v1620, %v1628
    %v1631 = vtanh.pop %v1630
    %1633 = vrot.lane.b32.xlu0 %v1631, 64
    %v1634 = vpop.permute.xlu0 %1633
    %v1636 = vmul.f32 %v1618, %v1634
    %v1637 = vld [vmem:[%s636] sm:$0xff]
    %1639 = vrot.lane.b32.xlu0 %v1636, 32
    %v1640 = vpop.permute.xlu0 %1639
    %v1641 = vsel %vm63, %v1640, 0
    %1643 = vmatprep.subr.mxu0 0.0
    %1644 = vmatpush1.msra.mxu0 %v1235
    %1645 = vmatprep.subr.mxu0 0.0
    %1646 = vmatpush1.msra.mxu0 %v1236
    %1647 = vmatprep.subr.mxu0 0.0
    %1648 = vmatpush1.msra.mxu0 %v1237
    %1649 = vmatprep.subr.mxu0 0.0
    %1650 = vmatpush1.msra.mxu0 %v1238
    %1651 = vmatprep.subr.mxu0 0.0
    %1652 = vmatpush1.msra.mxu0 0.0
    %1653 = vmatprep.subr.mxu0 0.0
    %1654 = vmatpush1.msra.mxu0 0.0
    %1655 = vmatprep.subr.mxu0 0.0
    %1656 = vmatpush1.msra.mxu0 0.0
    %1657 = vmatprep.subr.mxu0 0.0
    %1658 = vmatpush1.msra.mxu0 0.0
    %1659 = vmatprep.subr.mxu0 0.0
    %1660 = vmatpush1.msra.mxu0 0.0
    %1661 = vmatprep.subr.mxu0 0.0
    %1662 = vmatpush1.msra.mxu0 0.0
    %1663 = vmatprep.subr.mxu0 0.0
    %1664 = vmatpush1.msra.mxu0 0.0
    %1665 = vmatprep.subr.mxu0 0.0
    %1666 = vmatpush1.msra.mxu0 0.0
    %1667 = vmatprep.subr.mxu0 0.0
    %1668 = vmatpush1.msra.mxu0 0.0
    %1669 = vmatprep.subr.mxu0 0.0
    %1670 = vmatpush1.msra.mxu0 0.0
    %1671 = vmatprep.subr.mxu0 0.0
    %1672 = vmatpush1.msra.mxu0 0.0
    %1673 = vmatprep.subr.mxu0 0.0
    %1674 = vmatpush1.msra.mxu0 0.0
    %1675 = vmatprep.subr.mxu0 0.0
    %1676 = vmatpush1.msra.mxu0 0.0
    %1677 = vmatprep.subr.mxu0 0.0
    %1678 = vmatpush1.msra.mxu0 0.0
    %1679 = vmatprep.subr.mxu0 0.0
    %1680 = vmatpush1.msra.mxu0 0.0
    %1681 = vmatprep.subr.mxu0 0.0
    %1682 = vmatpush1.msra.mxu0 0.0
    %1683 = vmatprep.subr.mxu0 0.0
    %1684 = vmatpush1.msra.mxu0 0.0
    %1685 = vmatprep.subr.mxu0 0.0
    %1686 = vmatpush1.msra.mxu0 0.0
    %1687 = vmatprep.subr.mxu0 0.0
    %1688 = vmatpush1.msra.mxu0 0.0
    %1689 = vmatprep.subr.mxu0 0.0
    %1690 = vmatpush1.msra.mxu0 0.0
    %1691 = vmatprep.subr.mxu0 0.0
    %1692 = vmatpush1.msra.mxu0 0.0
    %1693 = vmatprep.subr.mxu0 0.0
    %1694 = vmatpush1.msra.mxu0 0.0
    %1695 = vmatprep.subr.mxu0 0.0
    %1696 = vmatpush1.msra.mxu0 0.0
    %1697 = vmatprep.subr.mxu0 0.0
    %1698 = vmatpush1.msra.mxu0 0.0
    %1699 = vmatprep.subr.mxu0 0.0
    %1700 = vmatpush1.msra.mxu0 0.0
    %1701 = vmatprep.subr.mxu0 0.0
    %1702 = vmatpush1.msra.mxu0 0.0
    %1703 = vmatprep.subr.mxu0 0.0
    %1704 = vmatpush1.msra.mxu0 0.0
    %1705 = vmatprep.subr.mxu0 0.0
    %1706 = vmatpush1.msra.mxu0 0.0
    %1707 = vmatprep.mubr.f32.mxu0 0.0
    %1708 = vmatmul.mubr.f32.gmra.mrb[0].mxu0 %v1641
    %v1709 = vpop.f32.mrb[0].mxu0
    %v1710 = vadd.f32 0.0, %v1709
    %v1711 = vpop.f32.mrb[0].mxu0
    %1712 = vdwg.mxu0
    %v1713 = vadd.f32 %v1637, %v1710
    %v1714 = vxor.u32 %v1713, 2147483648
    %v1715 = vmul.f32 %v1714, 1.442695
    %v1716 = vpow.pop %v1715
    %v1717 = vadd.f32 %v1716, 1.0
    %v1718 = vrcp.pop %v1717
    %v1719 = vmul.f32 1.0, %v1718
    %v1720 = vtanh.pop %v1713
    %v1721 = vmul.f32 %v1719, %v1630
    %1723 = vrot.lane.b32.xlu0 %v1720, 64
    %v1724 = vpop.permute.xlu0 %1723
    %v1726 = vmul.f32 %v1719, %v1724
    %1728 = vrot.lane.b32.xlu0 %v1726, 32
    %v1729 = vpop.permute.xlu0 %1728
    %v1731 = vadd.f32 %v1721, %v1729
    %v1732 = vtanh.pop %v1731
    %1734 = vrot.lane.b32.xlu0 %v1732, 64
    %v1735 = vpop.permute.xlu0 %1734
    %v1737 = vmul.f32 %v1719, %v1735
    %v1738 = vld [vmem:[%s745] sm:$0xff]
    %1740 = vrot.lane.b32.xlu0 %v1737, 32
    %v1741 = vpop.permute.xlu0 %1740
    %v1742 = vsel %vm63, %v1741, 0
    %1744 = vmatprep.subr.mxu0 0.0
    %1745 = vmatpush1.msra.mxu0 %v1235
    %1746 = vmatprep.subr.mxu0 0.0
    %1747 = vmatpush1.msra.mxu0 %v1236
    %1748 = vmatprep.subr.mxu0 0.0
    %1749 = vmatpush1.msra.mxu0 %v1237
    %1750 = vmatprep.subr.mxu0 0.0
    %1751 = vmatpush1.msra.mxu0 %v1238
    %1752 = vmatprep.subr.mxu0 0.0
    %1753 = vmatpush1.msra.mxu0 0.0
    %1754 = vmatprep.subr.mxu0 0.0
    %1755 = vmatpush1.msra.mxu0 0.0
    %1756 = vmatprep.subr.mxu0 0.0
    %1757 = vmatpush1.msra.mxu0 0.0
    %1758 = vmatprep.subr.mxu0 0.0
    %1759 = vmatpush1.msra.mxu0 0.0
    %1760 = vmatprep.subr.mxu0 0.0
    %1761 = vmatpush1.msra.mxu0 0.0
    %1762 = vmatprep.subr.mxu0 0.0
    %1763 = vmatpush1.msra.mxu0 0.0
    %1764 = vmatprep.subr.mxu0 0.0
    %1765 = vmatpush1.msra.mxu0 0.0
    %1766 = vmatprep.subr.mxu0 0.0
    %1767 = vmatpush1.msra.mxu0 0.0
    %1768 = vmatprep.subr.mxu0 0.0
    %1769 = vmatpush1.msra.mxu0 0.0
    %1770 = vmatprep.subr.mxu0 0.0
    %1771 = vmatpush1.msra.mxu0 0.0
    %1772 = vmatprep.subr.mxu0 0.0
    %1773 = vmatpush1.msra.mxu0 0.0
    %1774 = vmatprep.subr.mxu0 0.0
    %1775 = vmatpush1.msra.mxu0 0.0
    %1776 = vmatprep.subr.mxu0 0.0
    %1777 = vmatpush1.msra.mxu0 0.0
    %1778 = vmatprep.subr.mxu0 0.0
    %1779 = vmatpush1.msra.mxu0 0.0
    %1780 = vmatprep.subr.mxu0 0.0
    %1781 = vmatpush1.msra.mxu0 0.0
    %1782 = vmatprep.subr.mxu0 0.0
    %1783 = vmatpush1.msra.mxu0 0.0
    %1784 = vmatprep.subr.mxu0 0.0
    %1785 = vmatpush1.msra.mxu0 0.0
    %1786 = vmatprep.subr.mxu0 0.0
    %1787 = vmatpush1.msra.mxu0 0.0
    %1788 = vmatprep.subr.mxu0 0.0
    %1789 = vmatpush1.msra.mxu0 0.0
    %1790 = vmatprep.subr.mxu0 0.0
    %1791 = vmatpush1.msra.mxu0 0.0
    %1792 = vmatprep.subr.mxu0 0.0
    %1793 = vmatpush1.msra.mxu0 0.0
    %1794 = vmatprep.subr.mxu0 0.0
    %1795 = vmatpush1.msra.mxu0 0.0
    %1796 = vmatprep.subr.mxu0 0.0
    %1797 = vmatpush1.msra.mxu0 0.0
    %1798 = vmatprep.subr.mxu0 0.0
    %1799 = vmatpush1.msra.mxu0 0.0
    %1800 = vmatprep.subr.mxu0 0.0
    %1801 = vmatpush1.msra.mxu0 0.0
    %1802 = vmatprep.subr.mxu0 0.0
    %1803 = vmatpush1.msra.mxu0 0.0
    %1804 = vmatprep.subr.mxu0 0.0
    %1805 = vmatpush1.msra.mxu0 0.0
    %1806 = vmatprep.subr.mxu0 0.0
    %1807 = vmatpush1.msra.mxu0 0.0
    %1808 = vmatprep.mubr.f32.mxu0 0.0
    %1809 = vmatmul.mubr.f32.gmra.mrb[0].mxu0 %v1742
    %v1810 = vpop.f32.mrb[0].mxu0
    %v1811 = vadd.f32 0.0, %v1810
    %v1812 = vpop.f32.mrb[0].mxu0
    %1813 = vdwg.mxu0
    %v1814 = vadd.f32 %v1738, %v1811
    %v1815 = vxor.u32 %v1814, 2147483648
    %v1816 = vmul.f32 %v1815, 1.442695
    %v1817 = vpow.pop %v1816
    %v1818 = vadd.f32 %v1817, 1.0
    %v1819 = vrcp.pop %v1818
    %v1820 = vmul.f32 1.0, %v1819
    %v1821 = vtanh.pop %v1814
    %v1822 = vmul.f32 %v1820, %v1731
    %1824 = vrot.lane.b32.xlu0 %v1821, 64
    %v1825 = vpop.permute.xlu0 %1824
    %v1827 = vmul.f32 %v1820, %v1825
    %1829 = vrot.lane.b32.xlu0 %v1827, 32
    %v1830 = vpop.permute.xlu0 %1829
    %v1832 = vadd.f32 %v1822, %v1830
    %v1833 = vtanh.pop %v1832
    %1835 = vrot.lane.b32.xlu0 %v1833, 64
    %v1836 = vpop.permute.xlu0 %1835
    %v1838 = vmul.f32 %v1820, %v1836
    %v1839 = vld [vmem:[%s854] sm:$0xff]
    %1841 = vrot.lane.b32.xlu0 %v1838, 32
    %v1842 = vpop.permute.xlu0 %1841
    %v1843 = vsel %vm63, %v1842, 0
    %1845 = vmatprep.subr.mxu0 0.0
    %1846 = vmatpush1.msra.mxu0 %v1235
    %1847 = vmatprep.subr.mxu0 0.0
    %1848 = vmatpush1.msra.mxu0 %v1236
    %1849 = vmatprep.subr.mxu0 0.0
    %1850 = vmatpush1.msra.mxu0 %v1237
    %1851 = vmatprep.subr.mxu0 0.0
    %1852 = vmatpush1.msra.mxu0 %v1238
    %1853 = vmatprep.subr.mxu0 0.0
    %1854 = vmatpush1.msra.mxu0 0.0
    %1855 = vmatprep.subr.mxu0 0.0
    %1856 = vmatpush1.msra.mxu0 0.0
    %1857 = vmatprep.subr.mxu0 0.0
    %1858 = vmatpush1.msra.mxu0 0.0
    %1859 = vmatprep.subr.mxu0 0.0
    %1860 = vmatpush1.msra.mxu0 0.0
    %1861 = vmatprep.subr.mxu0 0.0
    %1862 = vmatpush1.msra.mxu0 0.0
    %1863 = vmatprep.subr.mxu0 0.0
    %1864 = vmatpush1.msra.mxu0 0.0
    %1865 = vmatprep.subr.mxu0 0.0
    %1866 = vmatpush1.msra.mxu0 0.0
    %1867 = vmatprep.subr.mxu0 0.0
    %1868 = vmatpush1.msra.mxu0 0.0
    %1869 = vmatprep.subr.mxu0 0.0
    %1870 = vmatpush1.msra.mxu0 0.0
    %1871 = vmatprep.subr.mxu0 0.0
    %1872 = vmatpush1.msra.mxu0 0.0
    %1873 = vmatprep.subr.mxu0 0.0
    %1874 = vmatpush1.msra.mxu0 0.0
    %1875 = vmatprep.subr.mxu0 0.0
    %1876 = vmatpush1.msra.mxu0 0.0
    %1877 = vmatprep.subr.mxu0 0.0
    %1878 = vmatpush1.msra.mxu0 0.0
    %1879 = vmatprep.subr.mxu0 0.0
    %1880 = vmatpush1.msra.mxu0 0.0
    %1881 = vmatprep.subr.mxu0 0.0
    %1882 = vmatpush1.msra.mxu0 0.0
    %1883 = vmatprep.subr.mxu0 0.0
    %1884 = vmatpush1.msra.mxu0 0.0
    %1885 = vmatprep.subr.mxu0 0.0
    %1886 = vmatpush1.msra.mxu0 0.0
    %1887 = vmatprep.subr.mxu0 0.0
    %1888 = vmatpush1.msra.mxu0 0.0
    %1889 = vmatprep.subr.mxu0 0.0
    %1890 = vmatpush1.msra.mxu0 0.0
    %1891 = vmatprep.subr.mxu0 0.0
    %1892 = vmatpush1.msra.mxu0 0.0
    %1893 = vmatprep.subr.mxu0 0.0
    %1894 = vmatpush1.msra.mxu0 0.0
    %1895 = vmatprep.subr.mxu0 0.0
    %1896 = vmatpush1.msra.mxu0 0.0
    %1897 = vmatprep.subr.mxu0 0.0
    %1898 = vmatpush1.msra.mxu0 0.0
    %1899 = vmatprep.subr.mxu0 0.0
    %1900 = vmatpush1.msra.mxu0 0.0
    %1901 = vmatprep.subr.mxu0 0.0
    %1902 = vmatpush1.msra.mxu0 0.0
    %1903 = vmatprep.subr.mxu0 0.0
    %1904 = vmatpush1.msra.mxu0 0.0
    %1905 = vmatprep.subr.mxu0 0.0
    %1906 = vmatpush1.msra.mxu0 0.0
    %1907 = vmatprep.subr.mxu0 0.0
    %1908 = vmatpush1.msra.mxu0 0.0
    %1909 = vmatprep.mubr.f32.mxu0 0.0
    %1910 = vmatmul.mubr.f32.gmra.mrb[0].mxu0 %v1843
    %v1911 = vpop.f32.mrb[0].mxu0
    %v1912 = vadd.f32 0.0, %v1911
    %v1913 = vpop.f32.mrb[0].mxu0
    %1914 = vdwg.mxu0
    %v1915 = vadd.f32 %v1839, %v1912
    %v1916 = vxor.u32 %v1915, 2147483648
    %v1917 = vmul.f32 %v1916, 1.442695
    %v1918 = vpow.pop %v1917
    %v1919 = vadd.f32 %v1918, 1.0
    %v1920 = vrcp.pop %v1919
    %v1921 = vmul.f32 1.0, %v1920
    %v1922 = vtanh.pop %v1915
    %v1923 = vmul.f32 %v1921, %v1832
    %1925 = vrot.lane.b32.xlu0 %v1922, 64
    %v1926 = vpop.permute.xlu0 %1925
    %v1928 = vmul.f32 %v1921, %v1926
    %1930 = vrot.lane.b32.xlu0 %v1928, 32
    %v1931 = vpop.permute.xlu0 %1930
    %v1933 = vadd.f32 %v1923, %v1931
    %v1934 = vtanh.pop %v1933
    %1936 = vrot.lane.b32.xlu0 %v1934, 64
    %v1937 = vpop.permute.xlu0 %1936
    %v1939 = vmul.f32 %v1921, %v1937
    %v1940 = vld [vmem:[%s963] sm:$0xff]
    %1942 = vrot.lane.b32.xlu0 %v1939, 32
    %v1943 = vpop.permute.xlu0 %1942
    %v1944 = vsel %vm63, %v1943, 0
    %1946 = vmatprep.subr.mxu0 0.0
    %1947 = vmatpush1.msra.mxu0 %v1235
    %1948 = vmatprep.subr.mxu0 0.0
    %1949 = vmatpush1.msra.mxu0 %v1236
    %1950 = vmatprep.subr.mxu0 0.0
    %1951 = vmatpush1.msra.mxu0 %v1237
    %1952 = vmatprep.subr.mxu0 0.0
    %1953 = vmatpush1.msra.mxu0 %v1238
    %1954 = vmatprep.subr.mxu0 0.0
    %1955 = vmatpush1.msra.mxu0 0.0
    %1956 = vmatprep.subr.mxu0 0.0
    %1957 = vmatpush1.msra.mxu0 0.0
    %1958 = vmatprep.subr.mxu0 0.0
    %1959 = vmatpush1.msra.mxu0 0.0
    %1960 = vmatprep.subr.mxu0 0.0
    %1961 = vmatpush1.msra.mxu0 0.0
    %1962 = vmatprep.subr.mxu0 0.0
    %1963 = vmatpush1.msra.mxu0 0.0
    %1964 = vmatprep.subr.mxu0 0.0
    %1965 = vmatpush1.msra.mxu0 0.0
    %1966 = vmatprep.subr.mxu0 0.0
    %1967 = vmatpush1.msra.mxu0 0.0
    %1968 = vmatprep.subr.mxu0 0.0
    %1969 = vmatpush1.msra.mxu0 0.0
    %1970 = vmatprep.subr.mxu0 0.0
    %1971 = vmatpush1.msra.mxu0 0.0
    %1972 = vmatprep.subr.mxu0 0.0
    %1973 = vmatpush1.msra.mxu0 0.0
    %1974 = vmatprep.subr.mxu0 0.0
    %1975 = vmatpush1.msra.mxu0 0.0
    %1976 = vmatprep.subr.mxu0 0.0
    %1977 = vmatpush1.msra.mxu0 0.0
    %1978 = vmatprep.subr.mxu0 0.0
    %1979 = vmatpush1.msra.mxu0 0.0
    %1980 = vmatprep.subr.mxu0 0.0
    %1981 = vmatpush1.msra.mxu0 0.0
    %1982 = vmatprep.subr.mxu0 0.0
    %1983 = vmatpush1.msra.mxu0 0.0
    %1984 = vmatprep.subr.mxu0 0.0
    %1985 = vmatpush1.msra.mxu0 0.0
    %1986 = vmatprep.subr.mxu0 0.0
    %1987 = vmatpush1.msra.mxu0 0.0
    %1988 = vmatprep.subr.mxu0 0.0
    %1989 = vmatpush1.msra.mxu0 0.0
    %1990 = vmatprep.subr.mxu0 0.0
    %1991 = vmatpush1.msra.mxu0 0.0
    %1992 = vmatprep.subr.mxu0 0.0
    %1993 = vmatpush1.msra.mxu0 0.0
    %1994 = vmatprep.subr.mxu0 0.0
    %1995 = vmatpush1.msra.mxu0 0.0
    %1996 = vmatprep.subr.mxu0 0.0
    %1997 = vmatpush1.msra.mxu0 0.0
    %1998 = vmatprep.subr.mxu0 0.0
    %1999 = vmatpush1.msra.mxu0 0.0
    %2000 = vmatprep.subr.mxu0 0.0
    %2001 = vmatpush1.msra.mxu0 0.0
    %2002 = vmatprep.subr.mxu0 0.0
    %2003 = vmatpush1.msra.mxu0 0.0
    %2004 = vmatprep.subr.mxu0 0.0
    %2005 = vmatpush1.msra.mxu0 0.0
    %2006 = vmatprep.subr.mxu0 0.0
    %2007 = vmatpush1.msra.mxu0 0.0
    %2008 = vmatprep.subr.mxu0 0.0
    %2009 = vmatpush1.msra.mxu0 0.0
    %2010 = vmatprep.mubr.f32.mxu0 0.0
    %2011 = vmatmul.mubr.f32.gmra.mrb[0].mxu0 %v1944
    %v2012 = vpop.f32.mrb[0].mxu0
    %v2013 = vadd.f32 0.0, %v2012
    %v2014 = vpop.f32.mrb[0].mxu0
    %2015 = vdwg.mxu0
    %v2016 = vadd.f32 %v1940, %v2013
    %v2017 = vxor.u32 %v2016, 2147483648
    %v2018 = vmul.f32 %v2017, 1.442695
    %v2019 = vpow.pop %v2018
    %v2020 = vadd.f32 %v2019, 1.0
    %v2021 = vrcp.pop %v2020
    %v2022 = vmul.f32 1.0, %v2021
    %v2023 = vtanh.pop %v2016
    %v2024 = vmul.f32 %v2022, %v1933
    %2026 = vrot.lane.b32.xlu0 %v2023, 64
    %v2027 = vpop.permute.xlu0 %2026
    %v2029 = vmul.f32 %v2022, %v2027
    %2031 = vrot.lane.b32.xlu0 %v2029, 32
    %v2032 = vpop.permute.xlu0 %2031
    %v2034 = vadd.f32 %v2024, %v2032
    %v2035 = vtanh.pop %v2034
    %2037 = vrot.lane.b32.xlu0 %v2035, 64
    %v2038 = vpop.permute.xlu0 %2037
    %v2040 = vmul.f32 %v2022, %v2038
    %2042 = vrot.lane.b32.xlu0 %v2040, 32
    %v2043 = vpop.permute.xlu0 %2042
    %s2045 = scalar_lea.vmem [#allocation7], 8
    %2046 = vst.msk [vmem:[%s2045] sm:$0xff] %vm63, %v2043
    %2048 = vrot.lane.b32.xlu0 %v2034, 96
    %v2049 = vpop.permute.xlu0 %2048
    %s2051 = scalar_lea.vmem [#allocation8], 8
    %2052 = vst.msk [vmem:[%s2051] sm:$0xff] %vm63, %v2049
    // Predicated region
    $region34: #{tpu_custom_call.1} parent=1 // pred_check
      _
    $region35: #{tpu_custom_call.1} parent=1 // pred_check_branch
      %2054 = sbr.rel (0) target = $region37
    $region36: #{tpu_custom_call.1} parent=1 // pred_region
      %s2056 = ssub.s32 256, 256
      %2057 = vsyncadd [#allocation6], %s2056
      %s2058 = sshll.u32 [#allocation7], 4
      %s2059 = int_to_ptr.vmem [resolvable:$true] %s2058
      %2064 = dma.vmem_to_hbm [thread:$0]  %s2059, 256, %s7, [#allocation6], 128, 128, 8
    $region37: #{tpu_custom_call.1} parent=1 // pred_fallthru
      _
    // Predicated region
    $region38: #{tpu_custom_call.1} parent=1 // pred_check
      _
    $region39: #{tpu_custom_call.1} parent=1 // pred_check_branch
      %2066 = sbr.rel (0) target = $region41
    $region40: #{tpu_custom_call.1} parent=1 // pred_region
      %s2068 = ssub.s32 256, 256
      %2069 = vsyncadd [#allocation9], %s2068
      %s2070 = sshll.u32 [#allocation8], 4
      %s2071 = int_to_ptr.vmem [resolvable:$true] %s2070
      %2076 = dma.vmem_to_hbm [thread:$0]  %s2071, 256, %s8, [#allocation9], 128, 128, 8
    $region41: #{tpu_custom_call.1} parent=1 // pred_fallthru
      _
    // Predicated region
    $region42: #{tpu_custom_call.1} parent=1 // pred_check
      _
    $region43: #{tpu_custom_call.1} parent=1 // pred_check_branch
      %2078 = sbr.rel (0) target = $region45
    $region44: #{tpu_custom_call.1} parent=1 // pred_region
      %2079 = dma.done [#allocation6], 256
    $region45: #{tpu_custom_call.1} parent=1 // pred_fallthru
      _
    // Predicated region
    $region46: #{tpu_custom_call.1} parent=1 // pred_check
      _
    $region47: #{tpu_custom_call.1} parent=1 // pred_check_branch
      %2081 = sbr.rel (0) target = $region49
    $region48: #{tpu_custom_call.1} parent=1 // pred_region
      %2082 = dma.done [#allocation9], 256
    $region49: #{tpu_custom_call.1} parent=1 // pred_fallthru
      _
    %2083 = vsyncpa [#allocation5], 1
    %2084 = vsyncpa [#allocation6], 1
    %2085 = vsyncpa [#allocation9], 1

</llo_original>
